<compile_context>
chip_gen: v6e
topology: v6e:2x2x1
jax: 0.10.0
libtpu: 0.0.40
codegen_flags: <defaults>
</compile_context>

<pallas_src>
import functools
import math

import jax
import jax.numpy as jnp
from jax.experimental import pallas as pl
from jax.experimental.pallas import tpu as pltpu

LN_EPS = 1e-5   # nn.LayerNorm default eps
C_IN = 3        # fc1 in_features
HID = 32        # fc1/fc2 out_features (and LayerNorm width)


def _round_up(x, m):
    return (x + m - 1) // m * m


def _hebbian_kernel(x_ref, w1_ref, b1_ref, g1_ref, be1_ref,
                    w2_ref, b2_ref, g2_ref, be2_ref, o_ref):
    # x_ref: (C_IN, TM) -- features on sublanes, rows on lanes (lane-dense).
    x = x_ref[...].astype(jnp.float32)
    w1 = w1_ref[...]                                    # (HID, C_IN)

    # fc1: (HID, C_IN) @ (C_IN, TM) with K = 3 -> VPU broadcast MACs
    # (keeps the MXU free and avoids a nearly-empty MXU pass).
    h = w1[:, 0:1] * x[0:1, :]
    for k in range(1, C_IN):
        h = h + w1[:, k:k + 1] * x[k:k + 1, :]
    h = h + b1_ref[...]                                 # (HID, TM)

    def _ln_relu(hh, g, b):
        # LayerNorm over the feature (sublane) axis, biased variance, eps=1e-5.
        mu = jnp.mean(hh, axis=0, keepdims=True)        # (1, TM)
        d = hh - mu
        var = jnp.mean(d * d, axis=0, keepdims=True)    # (1, TM)
        hn = d * jax.lax.rsqrt(var + LN_EPS) * g + b
        return jnp.maximum(hn, 0.0)

    a1 = _ln_relu(h, g1_ref[...], be1_ref[...])         # (HID, TM)

    # fc2: (HID, HID) @ (HID, TM) on the MXU, N = TM keeps the array full.
    h2 = jnp.dot(w2_ref[...], a1, preferred_element_type=jnp.float32)
    h2 = h2 + b2_ref[...]

    o_ref[...] = _ln_relu(h2, g2_ref[...], be2_ref[...]).astype(o_ref.dtype)


@functools.partial(jax.jit, static_argnames=("tile_m",))
def hebbian_forward(x, location, params, *, tile_m=4096):
    """Pallas equivalent of HebbianBasicCNN.forward (attention* modes).

    x: (..., 3) float32, location unused.  Returns (..., 32) float32.
    """
    del location  # unused, same as the PyTorch module
    assert x.shape[-1] == C_IN
    lead = x.shape[:-1]
    n = math.prod(lead)

    # Feature-major (lane-dense) layout: (C_IN, N).  Layout plumbing only.
    xt = jnp.asarray(x, jnp.float32).reshape(n, C_IN).T

    # Row tiling on the lane axis; pad rows to a tile multiple so any
    # frame/batch/patch count works (pad lanes are computed then sliced off).
    tile_m = _round_up(tile_m, 128)
    tile = min(tile_m, _round_up(n, 128))
    n_pad = _round_up(n, tile)
    if n_pad != n:
        xt = jnp.pad(xt, ((0, 0), (0, n_pad - n)))

    w1 = params["w1"]                        # (HID, C_IN) -- PyTorch (out, in)
    b1 = params["b1"].reshape(HID, 1)
    g1 = params["gamma1"].reshape(HID, 1)
    be1 = params["beta1"].reshape(HID, 1)
    w2 = params["w2"]                        # (HID, HID)
    b2 = params["b2"].reshape(HID, 1)
    g2 = params["gamma2"].reshape(HID, 1)
    be2 = params["beta2"].reshape(HID, 1)

    const = lambda i: (0, 0)  # small params stay resident; DMA'd once
    out = pl.pallas_call(
        _hebbian_kernel,
        out_shape=jax.ShapeDtypeStruct((HID, n_pad), jnp.float32),
        grid=(n_pad // tile,),
        in_specs=[
            pl.BlockSpec((C_IN, tile), lambda i: (0, i)),   # x^T row tile
            pl.BlockSpec((HID, C_IN), const),               # fc1 weight
            pl.BlockSpec((HID, 1), const),                  # fc1 bias
            pl.BlockSpec((HID, 1), const),                  # ln1 gamma
            pl.BlockSpec((HID, 1), const),                  # ln1 beta
            pl.BlockSpec((HID, HID), const),                # fc2 weight
            pl.BlockSpec((HID, 1), const),                  # fc2 bias
            pl.BlockSpec((HID, 1), const),                  # ln2 gamma
            pl.BlockSpec((HID, 1), const),                  # ln2 beta
        ],
        out_specs=pl.BlockSpec((HID, tile), lambda i: (0, i)),
        compiler_params=pltpu.CompilerParams(
            dimension_semantics=("parallel",),
        ),
    )(xt, w1, b1, g1, be1, w2, b2, g2, be2)

    y = out[:, :n].T.reshape(*lead, HID)
    return y


def init_params(key):
    """Deterministic params matching the module shapes (PyTorch layout).

    fc1: Linear(3, 32); ln1: LayerNorm(32); fc2: Linear(32, 32); ln2: LayerNorm(32).
    gamma/beta are randomized (instead of the 1/0 init) so the test exercises them.
    """
    k1w, k1b, k2w, k2b, kg1, kb1, kg2, kb2 = jax.random.split(key, 8)
    return {
        "w1": 0.3 * jax.random.normal(k1w, (HID, C_IN), jnp.float32),
        "b1": 0.1 * jax.random.normal(k1b, (HID,), jnp.float32),
        "gamma1": 1.0 + 0.1 * jax.random.normal(kg1, (HID,), jnp.float32),
        "beta1": 0.1 * jax.random.normal(kb1, (HID,), jnp.float32),
        "w2": 0.2 * jax.random.normal(k2w, (HID, HID), jnp.float32),
        "b2": 0.1 * jax.random.normal(k2b, (HID,), jnp.float32),
        "gamma2": 1.0 + 0.1 * jax.random.normal(kg2, (HID,), jnp.float32),
        "beta2": 0.1 * jax.random.normal(kb2, (HID,), jnp.float32),
    }


def hebbian_reference(x, params):
    """Plain-JAX reference mirroring the PyTorch forward, for verification."""
    def ln(h, g, b):
        mu = jnp.mean(h, axis=-1, keepdims=True)
        var = jnp.mean((h - mu) ** 2, axis=-1, keepdims=True)
        return (h - mu) / jnp.sqrt(var + LN_EPS) * g + b

    h = x @ params["w1"].T + params["b1"]
    h = jax.nn.relu(ln(h, params["gamma1"], params["beta1"]))
    h = h @ params["w2"].T + params["b2"]
    return jax.nn.relu(ln(h, params["gamma2"], params["beta2"]))


if __name__ == "__main__":
    key = jax.random.PRNGKey(0)
    kp, kx, kl, kx2 = jax.random.split(key, 4)

    params = init_params(kp)

    # Shapes consistent with the attention_* modes (small test sizes):
    # x: (num_frame, num_batch*num_patch, 3), location unused.
    num_frame, num_batch, num_patch = 2, 2, 16 * 16
    x = jax.random.normal(kx, (num_frame, num_batch * num_patch, C_IN), jnp.float32)
    location = jax.random.normal(kl, (num_frame, num_batch, 2), jnp.float32)  # unused

    y = jax.block_until_ready(hebbian_forward(x, location, params))
    assert y.shape == (num_frame, num_batch * num_patch, HID)
    y_ref = hebbian_reference(x, params)
    assert jnp.allclose(y, y_ref, atol=1e-4, rtol=1e-4), "mismatch vs JAX reference"

    # Ragged row count (3*7*19 = 399 rows): exercises the pad-to-tile / slice path.
    x2 = jax.random.normal(kx2, (3, 7, 19, C_IN), jnp.float32)
    y2 = jax.block_until_ready(hebbian_forward(x2, None, params))
    assert y2.shape == (3, 7, 19, HID)
    y2_ref = hebbian_reference(x2, params)
    assert jnp.allclose(y2, y2_ref, atol=1e-4, rtol=1e-4), "ragged mismatch vs reference"

    print("KERNEL_OK")
</pallas_src>

<mosaic_0001>
module attributes {stable_mosaic.version = 11 : i64} {
  func.func @_hebbian_kernel(%arg0: i32, %arg1: memref<3x1024xf32, #tpu.memory_space<vmem>>, %arg2: memref<32x3xf32, #tpu.memory_space<vmem>>, %arg3: memref<32x1xf32, #tpu.memory_space<vmem>>, %arg4: memref<32x1xf32, #tpu.memory_space<vmem>>, %arg5: memref<32x1xf32, #tpu.memory_space<vmem>>, %arg6: memref<32x32xf32, #tpu.memory_space<vmem>>, %arg7: memref<32x1xf32, #tpu.memory_space<vmem>>, %arg8: memref<32x1xf32, #tpu.memory_space<vmem>>, %arg9: memref<32x1xf32, #tpu.memory_space<vmem>>, %arg10: memref<32x1024xf32, #tpu.memory_space<vmem>>) attributes {dimension_semantics = [#tpu.dimension_semantics<parallel>], iteration_bounds = array<i64: 1>, scalar_prefetch = 0 : i64, scratch_operands = 0 : i64, tpu.core_type = #tpu.core_type<tc>, window_params = [{transform_indices = @transform_0, window_bounds = array<i64: 3, 1024>}, {pipeline_mode = #tpu.pipeline_mode<synchronous>, transform_indices = @transform_1, window_bounds = array<i64: 32, 3>}, {pipeline_mode = #tpu.pipeline_mode<synchronous>, transform_indices = @transform_2, window_bounds = array<i64: 32, 1>}, {pipeline_mode = #tpu.pipeline_mode<synchronous>, transform_indices = @transform_3, window_bounds = array<i64: 32, 1>}, {pipeline_mode = #tpu.pipeline_mode<synchronous>, transform_indices = @transform_4, window_bounds = array<i64: 32, 1>}, {pipeline_mode = #tpu.pipeline_mode<synchronous>, transform_indices = @transform_5, window_bounds = array<i64: 32, 32>}, {pipeline_mode = #tpu.pipeline_mode<synchronous>, transform_indices = @transform_6, window_bounds = array<i64: 32, 1>}, {pipeline_mode = #tpu.pipeline_mode<synchronous>, transform_indices = @transform_7, window_bounds = array<i64: 32, 1>}, {pipeline_mode = #tpu.pipeline_mode<synchronous>, transform_indices = @transform_8, window_bounds = array<i64: 32, 1>}, {transform_indices = @transform_9, window_bounds = array<i64: 32, 1024>}]} {
    %c0 = arith.constant 0 : index
    %c0_0 = arith.constant 0 : index
    %0 = vector.load %arg1[%c0, %c0_0] : memref<3x1024xf32, #tpu.memory_space<vmem>>, vector<3x1024xf32>
    %c0_1 = arith.constant 0 : index
    %c0_2 = arith.constant 0 : index
    %1 = vector.load %arg2[%c0_1, %c0_2] : memref<32x3xf32, #tpu.memory_space<vmem>>, vector<32x3xf32>
    %2 = vector.extract_strided_slice %1 {offsets = [0, 0], sizes = [32, 1], strides = [1, 1]} : vector<32x3xf32> to vector<32x1xf32>
    %3 = vector.extract_strided_slice %0 {offsets = [0, 0], sizes = [1, 1024], strides = [1, 1]} : vector<3x1024xf32> to vector<1x1024xf32>
    %4 = vector.broadcast %2 : vector<32x1xf32> to vector<32x1024xf32>
    %5 = vector.broadcast %3 : vector<1x1024xf32> to vector<32x1024xf32>
    %6 = arith.mulf %4, %5 : vector<32x1024xf32>
    %7 = vector.extract_strided_slice %1 {offsets = [0, 1], sizes = [32, 1], strides = [1, 1]} : vector<32x3xf32> to vector<32x1xf32>
    %8 = vector.extract_strided_slice %0 {offsets = [1, 0], sizes = [1, 1024], strides = [1, 1]} : vector<3x1024xf32> to vector<1x1024xf32>
    %9 = vector.broadcast %7 : vector<32x1xf32> to vector<32x1024xf32>
    %10 = vector.broadcast %8 : vector<1x1024xf32> to vector<32x1024xf32>
    %11 = arith.mulf %9, %10 : vector<32x1024xf32>
    %12 = arith.addf %6, %11 : vector<32x1024xf32>
    %13 = vector.extract_strided_slice %1 {offsets = [0, 2], sizes = [32, 1], strides = [1, 1]} : vector<32x3xf32> to vector<32x1xf32>
    %14 = vector.extract_strided_slice %0 {offsets = [2, 0], sizes = [1, 1024], strides = [1, 1]} : vector<3x1024xf32> to vector<1x1024xf32>
    %15 = vector.broadcast %13 : vector<32x1xf32> to vector<32x1024xf32>
    %16 = vector.broadcast %14 : vector<1x1024xf32> to vector<32x1024xf32>
    %17 = arith.mulf %15, %16 : vector<32x1024xf32>
    %18 = arith.addf %12, %17 : vector<32x1024xf32>
    %c0_3 = arith.constant 0 : index
    %c0_4 = arith.constant 0 : index
    %19 = vector.load %arg3[%c0_3, %c0_4] : memref<32x1xf32, #tpu.memory_space<vmem>>, vector<32x1xf32>
    %20 = vector.broadcast %19 : vector<32x1xf32> to vector<32x1024xf32>
    %21 = arith.addf %18, %20 : vector<32x1024xf32>
    %c0_5 = arith.constant 0 : index
    %c0_6 = arith.constant 0 : index
    %22 = vector.load %arg4[%c0_5, %c0_6] : memref<32x1xf32, #tpu.memory_space<vmem>>, vector<32x1xf32>
    %c0_7 = arith.constant 0 : index
    %c0_8 = arith.constant 0 : index
    %23 = vector.load %arg5[%c0_7, %c0_8] : memref<32x1xf32, #tpu.memory_space<vmem>>, vector<32x1xf32>
    %cst = arith.constant dense<0.000000e+00> : vector<1024xf32>
    %24 = vector.multi_reduction <add>, %21, %cst [0] : vector<32x1024xf32> to vector<1024xf32>
    %25 = vector.shape_cast %24 : vector<1024xf32> to vector<1x1024xf32>
    %cst_9 = arith.constant 3.200000e+01 : f32
    %26 = vector.broadcast %cst_9 : f32 to vector<1x1024xf32>
    %27 = arith.divf %25, %26 : vector<1x1024xf32>
    %28 = vector.broadcast %27 : vector<1x1024xf32> to vector<32x1024xf32>
    %29 = arith.subf %21, %28 : vector<32x1024xf32>
    %30 = arith.mulf %29, %29 : vector<32x1024xf32>
    %cst_10 = arith.constant dense<0.000000e+00> : vector<1024xf32>
    %31 = vector.multi_reduction <add>, %30, %cst_10 [0] : vector<32x1024xf32> to vector<1024xf32>
    %32 = vector.shape_cast %31 : vector<1024xf32> to vector<1x1024xf32>
    %cst_11 = arith.constant 3.200000e+01 : f32
    %33 = vector.broadcast %cst_11 : f32 to vector<1x1024xf32>
    %34 = arith.divf %32, %33 : vector<1x1024xf32>
    %cst_12 = arith.constant 9.99999974E-6 : f32
    %35 = vector.broadcast %cst_12 : f32 to vector<1x1024xf32>
    %36 = arith.addf %34, %35 : vector<1x1024xf32>
    %37 = math.rsqrt %36 : vector<1x1024xf32>
    %38 = vector.broadcast %37 : vector<1x1024xf32> to vector<32x1024xf32>
    %39 = arith.mulf %29, %38 : vector<32x1024xf32>
    %40 = vector.broadcast %22 : vector<32x1xf32> to vector<32x1024xf32>
    %41 = arith.mulf %39, %40 : vector<32x1024xf32>
    %42 = vector.broadcast %23 : vector<32x1xf32> to vector<32x1024xf32>
    %43 = arith.addf %41, %42 : vector<32x1024xf32>
    %cst_13 = arith.constant 0.000000e+00 : f32
    %44 = vector.broadcast %cst_13 : f32 to vector<32x1024xf32>
    %45 = arith.maximumf %43, %44 : vector<32x1024xf32>
    %c0_14 = arith.constant 0 : index
    %c0_15 = arith.constant 0 : index
    %46 = vector.load %arg6[%c0_14, %c0_15] : memref<32x32xf32, #tpu.memory_space<vmem>>, vector<32x32xf32>
    %cst_16 = arith.constant dense<0.000000e+00> : vector<32x1024xf32>
    %47 = tpu.matmul %46, %45, %cst_16 {dimension_numbers = #tpu.dot_dimension_numbers<[1], [0], [0], [1], [0, 0, 1, 1], [], []>} : vector<32x32xf32>, vector<32x1024xf32>, vector<32x1024xf32> -> vector<32x1024xf32>
    %c0_17 = arith.constant 0 : index
    %c0_18 = arith.constant 0 : index
    %48 = vector.load %arg7[%c0_17, %c0_18] : memref<32x1xf32, #tpu.memory_space<vmem>>, vector<32x1xf32>
    %49 = vector.broadcast %48 : vector<32x1xf32> to vector<32x1024xf32>
    %50 = arith.addf %47, %49 : vector<32x1024xf32>
    %c0_19 = arith.constant 0 : index
    %c0_20 = arith.constant 0 : index
    %51 = vector.load %arg8[%c0_19, %c0_20] : memref<32x1xf32, #tpu.memory_space<vmem>>, vector<32x1xf32>
    %c0_21 = arith.constant 0 : index
    %c0_22 = arith.constant 0 : index
    %52 = vector.load %arg9[%c0_21, %c0_22] : memref<32x1xf32, #tpu.memory_space<vmem>>, vector<32x1xf32>
    %cst_23 = arith.constant dense<0.000000e+00> : vector<1024xf32>
    %53 = vector.multi_reduction <add>, %50, %cst_23 [0] : vector<32x1024xf32> to vector<1024xf32>
    %54 = vector.shape_cast %53 : vector<1024xf32> to vector<1x1024xf32>
    %cst_24 = arith.constant 3.200000e+01 : f32
    %55 = vector.broadcast %cst_24 : f32 to vector<1x1024xf32>
    %56 = arith.divf %54, %55 : vector<1x1024xf32>
    %57 = vector.broadcast %56 : vector<1x1024xf32> to vector<32x1024xf32>
    %58 = arith.subf %50, %57 : vector<32x1024xf32>
    %59 = arith.mulf %58, %58 : vector<32x1024xf32>
    %cst_25 = arith.constant dense<0.000000e+00> : vector<1024xf32>
    %60 = vector.multi_reduction <add>, %59, %cst_25 [0] : vector<32x1024xf32> to vector<1024xf32>
    %61 = vector.shape_cast %60 : vector<1024xf32> to vector<1x1024xf32>
    %cst_26 = arith.constant 3.200000e+01 : f32
    %62 = vector.broadcast %cst_26 : f32 to vector<1x1024xf32>
    %63 = arith.divf %61, %62 : vector<1x1024xf32>
    %cst_27 = arith.constant 9.99999974E-6 : f32
    %64 = vector.broadcast %cst_27 : f32 to vector<1x1024xf32>
    %65 = arith.addf %63, %64 : vector<1x1024xf32>
    %66 = math.rsqrt %65 : vector<1x1024xf32>
    %67 = vector.broadcast %66 : vector<1x1024xf32> to vector<32x1024xf32>
    %68 = arith.mulf %58, %67 : vector<32x1024xf32>
    %69 = vector.broadcast %51 : vector<32x1xf32> to vector<32x1024xf32>
    %70 = arith.mulf %68, %69 : vector<32x1024xf32>
    %71 = vector.broadcast %52 : vector<32x1xf32> to vector<32x1024xf32>
    %72 = arith.addf %70, %71 : vector<32x1024xf32>
    %cst_28 = arith.constant 0.000000e+00 : f32
    %73 = vector.broadcast %cst_28 : f32 to vector<32x1024xf32>
    %74 = arith.maximumf %72, %73 : vector<32x1024xf32>
    %c0_29 = arith.constant 0 : index
    %c0_30 = arith.constant 0 : index
    %75 = vector.load %arg10[%c0_29, %c0_30] : memref<32x1024xf32, #tpu.memory_space<vmem>>, vector<32x1024xf32>
    tpu.vector_store %arg10[%c0_29, %c0_30], %74 {strides = array<i32>} : memref<32x1024xf32, #tpu.memory_space<vmem>>, vector<32x1024xf32>,
    return
  }
  func.func @transform_0(%arg0: i32) -> (i32, i32) {
    %c0_i32 = arith.constant 0 : i32
    %c0_i32_0 = arith.constant 0 : i32
    return %c0_i32, %arg0 : i32, i32
  }
  func.func @transform_1(%arg0: i32) -> (i32, i32) {
    %c0_i32 = arith.constant 0 : i32
    %c0_i32_0 = arith.constant 0 : i32
    %c0_i32_1 = arith.constant 0 : i32
    return %c0_i32, %c0_i32_0 : i32, i32
  }
  func.func @transform_2(%arg0: i32) -> (i32, i32) {
    %c0_i32 = arith.constant 0 : i32
    %c0_i32_0 = arith.constant 0 : i32
    %c0_i32_1 = arith.constant 0 : i32
    return %c0_i32, %c0_i32_0 : i32, i32
  }
  func.func @transform_3(%arg0: i32) -> (i32, i32) {
    %c0_i32 = arith.constant 0 : i32
    %c0_i32_0 = arith.constant 0 : i32
    %c0_i32_1 = arith.constant 0 : i32
    return %c0_i32, %c0_i32_0 : i32, i32
  }
  func.func @transform_4(%arg0: i32) -> (i32, i32) {
    %c0_i32 = arith.constant 0 : i32
    %c0_i32_0 = arith.constant 0 : i32
    %c0_i32_1 = arith.constant 0 : i32
    return %c0_i32, %c0_i32_0 : i32, i32
  }
  func.func @transform_5(%arg0: i32) -> (i32, i32) {
    %c0_i32 = arith.constant 0 : i32
    %c0_i32_0 = arith.constant 0 : i32
    %c0_i32_1 = arith.constant 0 : i32
    return %c0_i32, %c0_i32_0 : i32, i32
  }
  func.func @transform_6(%arg0: i32) -> (i32, i32) {
    %c0_i32 = arith.constant 0 : i32
    %c0_i32_0 = arith.constant 0 : i32
    %c0_i32_1 = arith.constant 0 : i32
    return %c0_i32, %c0_i32_0 : i32, i32
  }
  func.func @transform_7(%arg0: i32) -> (i32, i32) {
    %c0_i32 = arith.constant 0 : i32
    %c0_i32_0 = arith.constant 0 : i32
    %c0_i32_1 = arith.constant 0 : i32
    return %c0_i32, %c0_i32_0 : i32, i32
  }
  func.func @transform_8(%arg0: i32) -> (i32, i32) {
    %c0_i32 = arith.constant 0 : i32
    %c0_i32_0 = arith.constant 0 : i32
    %c0_i32_1 = arith.constant 0 : i32
    return %c0_i32, %c0_i32_0 : i32, i32
  }
  func.func @transform_9(%arg0: i32) -> (i32, i32) {
    %c0_i32 = arith.constant 0 : i32
    %c0_i32_0 = arith.constant 0 : i32
    return %c0_i32, %arg0 : i32, i32
  }
}

</mosaic_0001>

<llo_original>
// kernel: hebbian_forward.1
$region0: #{hebbian_forward.1}
  #allocation0 [shape = 'u32[]', space=smem, size = 0x4, offset = 0x4, fixed_abs, tag = 'smem constant byte address 0x4 - core index']
  #allocation1 [shape = 'u32[144,128]{1,0:T(1,128)}', space=vmem, size = 0x12000, scoped, tag = 'internal scratch']
  %s0 = inlined_call_operand.vmem [shape: f32[3,1024], index: 0, kind: input, shape index: {}]
  %s1 = inlined_call_operand.vmem [shape: f32[32,3], index: 1, kind: input, shape index: {}]
  %s2 = inlined_call_operand.vmem [shape: f32[32,1], index: 2, kind: input, shape index: {}]
  %s3 = inlined_call_operand.vmem [shape: f32[32,1], index: 3, kind: input, shape index: {}]
  %s4 = inlined_call_operand.vmem [shape: f32[32,1], index: 4, kind: input, shape index: {}]
  %s5 = inlined_call_operand.vmem [shape: f32[32,32], index: 5, kind: input, shape index: {}]
  %s6 = inlined_call_operand.vmem [shape: f32[32,1], index: 6, kind: input, shape index: {}]
  %s7 = inlined_call_operand.vmem [shape: f32[32,1], index: 7, kind: input, shape index: {}]
  %s8 = inlined_call_operand.vmem [shape: f32[32,1], index: 8, kind: input, shape index: {}]
  %s9 = inlined_call_operand.vmem [shape: f32[32,1024], index: 9, kind: output, shape index: {}]
  %s10 = sld [smem:[#allocation0]]
  $region46: #{hebbian_forward.1} parent=0
    _
  %s12 = ssub.s32 1, %s10
  %s13 = scalar_select 0, %s12, %s10
  // Predicated region
  $region2: #{hebbian_forward.1} parent=0 // pred_check
    _
  $region3: #{hebbian_forward.1} parent=0 // pred_check_branch
    %15 = sbr.rel (0) target = $region5
  $region4: #{hebbian_forward.1} parent=0 // pred_region
    _
  $region5: #{hebbian_forward.1} parent=0 // pred_fallthru
    _
  // Predicated region
  $region6: #{hebbian_forward.1} parent=0 // pred_check
    _
  $region7: #{hebbian_forward.1} parent=0 // pred_check_branch
    %17 = sbr.rel (0) target = $region9
  $region8: #{hebbian_forward.1} parent=0 // pred_region
    _
  $region9: #{hebbian_forward.1} parent=0 // pred_fallthru
    _
  // Predicated region
  $region10: #{hebbian_forward.1} parent=0 // pred_check
    _
  $region11: #{hebbian_forward.1} parent=0 // pred_check_branch
    %19 = sbr.rel (0) target = $region13
  $region12: #{hebbian_forward.1} parent=0 // pred_region
    _
  $region13: #{hebbian_forward.1} parent=0 // pred_fallthru
    _
  // Predicated region
  $region14: #{hebbian_forward.1} parent=0 // pred_check
    _
  $region15: #{hebbian_forward.1} parent=0 // pred_check_branch
    %21 = sbr.rel (0) target = $region17
  $region16: #{hebbian_forward.1} parent=0 // pred_region
    _
  $region17: #{hebbian_forward.1} parent=0 // pred_fallthru
    _
  // Predicated region
  $region18: #{hebbian_forward.1} parent=0 // pred_check
    _
  $region19: #{hebbian_forward.1} parent=0 // pred_check_branch
    %23 = sbr.rel (0) target = $region21
  $region20: #{hebbian_forward.1} parent=0 // pred_region
    _
  $region21: #{hebbian_forward.1} parent=0 // pred_fallthru
    _
  // Predicated region
  $region22: #{hebbian_forward.1} parent=0 // pred_check
    _
  $region23: #{hebbian_forward.1} parent=0 // pred_check_branch
    %25 = sbr.rel (0) target = $region25
  $region24: #{hebbian_forward.1} parent=0 // pred_region
    _
  $region25: #{hebbian_forward.1} parent=0 // pred_fallthru
    _
  // Predicated region
  $region26: #{hebbian_forward.1} parent=0 // pred_check
    _
  $region27: #{hebbian_forward.1} parent=0 // pred_check_branch
    %27 = sbr.rel (0) target = $region29
  $region28: #{hebbian_forward.1} parent=0 // pred_region
    _
  $region29: #{hebbian_forward.1} parent=0 // pred_fallthru
    _
  // Predicated region
  $region30: #{hebbian_forward.1} parent=0 // pred_check
    _
  $region31: #{hebbian_forward.1} parent=0 // pred_check_branch
    %29 = sbr.rel (0) target = $region33
  $region32: #{hebbian_forward.1} parent=0 // pred_region
    _
  $region33: #{hebbian_forward.1} parent=0 // pred_fallthru
    _
  // Predicated region
  $region34: #{hebbian_forward.1} parent=0 // pred_check
    _
  $region35: #{hebbian_forward.1} parent=0 // pred_check_branch
    %31 = sbr.rel (0) target = $region37
  $region36: #{hebbian_forward.1} parent=0 // pred_region
    _
  $region37: #{hebbian_forward.1} parent=0 // pred_fallthru
    _
  %v32 = vld [vmem:[%s0] sm:$0x77]
  %v33 = vld [vmem:[%s0 + $0x8] sm:$0x77]
  %v34 = vld [vmem:[%s0 + $0x10] sm:$0x77]
  %v35 = vld [vmem:[%s0 + $0x18] sm:$0x77]
  %v36 = vld [vmem:[%s1] sm:$0xff]
  %v37 = vld [vmem:[%s1 + $0x8] sm:$0xff]
  %v38 = vld [vmem:[%s1 + $0x10] sm:$0xff]
  %v39 = vld [vmem:[%s1 + $0x18] sm:$0xff]
  %41 = vset.pattern.permute.xlu0 0
  %42 = vperm.xlu0 %41, %v36
  %v43 = vpop.permute.xlu0 %42
  %46 = vset.pattern.permute.xlu0 0
  %47 = vperm.xlu0 %46, %v37
  %v48 = vpop.permute.xlu0 %47
  %51 = vset.pattern.permute.xlu0 0
  %52 = vperm.xlu0 %51, %v38
  %v53 = vpop.permute.xlu0 %52
  %56 = vset.pattern.permute.xlu0 0
  %57 = vperm.xlu0 %56, %v39
  %v58 = vpop.permute.xlu0 %57
  %v64 = vlaneseq
  %v65 = vshrl.u32 %v64, 7
  %v66 = vsub.s32 0, %v65
  %v67 = vrot.slane %v32, %v66
  %v68 = vlaneseq
  %v69 = vshrl.u32 %v68, 7
  %v70 = vsub.s32 4, %v69
  %v71 = vrot.slane %v32, %v70
  %v72 = vlaneseq
  %v73 = vshrl.u32 %v72, 7
  %v74 = vsub.s32 0, %v73
  %v75 = vrot.slane %v33, %v74
  %v76 = vlaneseq
  %v77 = vshrl.u32 %v76, 7
  %v78 = vsub.s32 4, %v77
  %v79 = vrot.slane %v33, %v78
  %v80 = vlaneseq
  %v81 = vshrl.u32 %v80, 7
  %v82 = vsub.s32 0, %v81
  %v83 = vrot.slane %v34, %v82
  %v84 = vlaneseq
  %v85 = vshrl.u32 %v84, 7
  %v86 = vsub.s32 4, %v85
  %v87 = vrot.slane %v34, %v86
  %v88 = vlaneseq
  %v89 = vshrl.u32 %v88, 7
  %v90 = vsub.s32 0, %v89
  %v91 = vrot.slane %v35, %v90
  %v92 = vlaneseq
  %v93 = vshrl.u32 %v92, 7
  %v94 = vsub.s32 4, %v93
  %v95 = vrot.slane %v35, %v94
  %v104 = vlaneseq
  %v105 = vshrl.u32 %v104, 7
  %v106 = vsub.s32 0, %v105
  %v107 = vrot.slane %v67, %v106
  %v108 = vlaneseq
  %v109 = vshrl.u32 %v108, 7
  %v110 = vsub.s32 0, %v109
  %v111 = vrot.slane %v71, %v110
  %v112 = vlaneseq
  %v113 = vshrl.u32 %v112, 7
  %v114 = vsub.s32 0, %v113
  %v115 = vrot.slane %v75, %v114
  %v116 = vlaneseq
  %v117 = vshrl.u32 %v116, 7
  %v118 = vsub.s32 0, %v117
  %v119 = vrot.slane %v79, %v118
  %v120 = vlaneseq
  %v121 = vshrl.u32 %v120, 7
  %v122 = vsub.s32 0, %v121
  %v123 = vrot.slane %v83, %v122
  %v124 = vlaneseq
  %v125 = vshrl.u32 %v124, 7
  %v126 = vsub.s32 0, %v125
  %v127 = vrot.slane %v87, %v126
  %v128 = vlaneseq
  %v129 = vshrl.u32 %v128, 7
  %v130 = vsub.s32 0, %v129
  %v131 = vrot.slane %v91, %v130
  %v132 = vlaneseq
  %v133 = vshrl.u32 %v132, 7
  %v134 = vsub.s32 0, %v133
  %v135 = vrot.slane %v95, %v134
  %v136 = vmul.f32 %v43, %v107
  %v137 = vmul.f32 %v43, %v111
  %v138 = vmul.f32 %v43, %v115
  %v139 = vmul.f32 %v43, %v119
  %v140 = vmul.f32 %v43, %v123
  %v141 = vmul.f32 %v43, %v127
  %v142 = vmul.f32 %v43, %v131
  %v143 = vmul.f32 %v43, %v135
  %v144 = vmul.f32 %v48, %v107
  %v145 = vmul.f32 %v48, %v111
  %v146 = vmul.f32 %v48, %v115
  %v147 = vmul.f32 %v48, %v119
  %v148 = vmul.f32 %v48, %v123
  %v149 = vmul.f32 %v48, %v127
  %v150 = vmul.f32 %v48, %v131
  %v151 = vmul.f32 %v48, %v135
  %v152 = vmul.f32 %v53, %v107
  %v153 = vmul.f32 %v53, %v111
  %v154 = vmul.f32 %v53, %v115
  %v155 = vmul.f32 %v53, %v119
  %v156 = vmul.f32 %v53, %v123
  %v157 = vmul.f32 %v53, %v127
  %v158 = vmul.f32 %v53, %v131
  %v159 = vmul.f32 %v53, %v135
  %v160 = vmul.f32 %v58, %v107
  %v161 = vmul.f32 %v58, %v111
  %v162 = vmul.f32 %v58, %v115
  %v163 = vmul.f32 %v58, %v119
  %v164 = vmul.f32 %v58, %v123
  %v165 = vmul.f32 %v58, %v127
  %v166 = vmul.f32 %v58, %v131
  %v167 = vmul.f32 %v58, %v135
  %168 = vset.pattern.permute.xlu0 1
  %169 = vperm.xlu0 %168, %v36
  %v170 = vpop.permute.xlu0 %169
  %172 = vset.pattern.permute.xlu0 1
  %173 = vperm.xlu0 %172, %v37
  %v174 = vpop.permute.xlu0 %173
  %176 = vset.pattern.permute.xlu0 1
  %177 = vperm.xlu0 %176, %v38
  %v178 = vpop.permute.xlu0 %177
  %180 = vset.pattern.permute.xlu0 1
  %181 = vperm.xlu0 %180, %v39
  %v182 = vpop.permute.xlu0 %181
  %v184 = vlaneseq
  %v185 = vshrl.u32 %v184, 7
  %v186 = vsub.s32 1, %v185
  %v187 = vrot.slane %v32, %v186
  %v188 = vlaneseq
  %v189 = vshrl.u32 %v188, 7
  %v190 = vsub.s32 5, %v189
  %v191 = vrot.slane %v32, %v190
  %v192 = vlaneseq
  %v193 = vshrl.u32 %v192, 7
  %v194 = vsub.s32 1, %v193
  %v195 = vrot.slane %v33, %v194
  %v196 = vlaneseq
  %v197 = vshrl.u32 %v196, 7
  %v198 = vsub.s32 5, %v197
  %v199 = vrot.slane %v33, %v198
  %v200 = vlaneseq
  %v201 = vshrl.u32 %v200, 7
  %v202 = vsub.s32 1, %v201
  %v203 = vrot.slane %v34, %v202
  %v204 = vlaneseq
  %v205 = vshrl.u32 %v204, 7
  %v206 = vsub.s32 5, %v205
  %v207 = vrot.slane %v34, %v206
  %v208 = vlaneseq
  %v209 = vshrl.u32 %v208, 7
  %v210 = vsub.s32 1, %v209
  %v211 = vrot.slane %v35, %v210
  %v212 = vlaneseq
  %v213 = vshrl.u32 %v212, 7
  %v214 = vsub.s32 5, %v213
  %v215 = vrot.slane %v35, %v214
  %v224 = vlaneseq
  %v225 = vshrl.u32 %v224, 7
  %v226 = vsub.s32 1, %v225
  %v227 = vrot.slane %v187, %v226
  %v228 = vlaneseq
  %v229 = vshrl.u32 %v228, 7
  %v230 = vsub.s32 1, %v229
  %v231 = vrot.slane %v191, %v230
  %v232 = vlaneseq
  %v233 = vshrl.u32 %v232, 7
  %v234 = vsub.s32 1, %v233
  %v235 = vrot.slane %v195, %v234
  %v236 = vlaneseq
  %v237 = vshrl.u32 %v236, 7
  %v238 = vsub.s32 1, %v237
  %v239 = vrot.slane %v199, %v238
  %v240 = vlaneseq
  %v241 = vshrl.u32 %v240, 7
  %v242 = vsub.s32 1, %v241
  %v243 = vrot.slane %v203, %v242
  %v244 = vlaneseq
  %v245 = vshrl.u32 %v244, 7
  %v246 = vsub.s32 1, %v245
  %v247 = vrot.slane %v207, %v246
  %v248 = vlaneseq
  %v249 = vshrl.u32 %v248, 7
  %v250 = vsub.s32 1, %v249
  %v251 = vrot.slane %v211, %v250
  %v252 = vlaneseq
  %v253 = vshrl.u32 %v252, 7
  %v254 = vsub.s32 1, %v253
  %v255 = vrot.slane %v215, %v254
  %v256 = vmul.f32 %v170, %v227
  %v257 = vmul.f32 %v170, %v231
  %v258 = vmul.f32 %v170, %v235
  %v259 = vmul.f32 %v170, %v239
  %v260 = vmul.f32 %v170, %v243
  %v261 = vmul.f32 %v170, %v247
  %v262 = vmul.f32 %v170, %v251
  %v263 = vmul.f32 %v170, %v255
  %v264 = vmul.f32 %v174, %v227
  %v265 = vmul.f32 %v174, %v231
  %v266 = vmul.f32 %v174, %v235
  %v267 = vmul.f32 %v174, %v239
  %v268 = vmul.f32 %v174, %v243
  %v269 = vmul.f32 %v174, %v247
  %v270 = vmul.f32 %v174, %v251
  %v271 = vmul.f32 %v174, %v255
  %v272 = vmul.f32 %v178, %v227
  %v273 = vmul.f32 %v178, %v231
  %v274 = vmul.f32 %v178, %v235
  %v275 = vmul.f32 %v178, %v239
  %v276 = vmul.f32 %v178, %v243
  %v277 = vmul.f32 %v178, %v247
  %v278 = vmul.f32 %v178, %v251
  %v279 = vmul.f32 %v178, %v255
  %v280 = vmul.f32 %v182, %v227
  %v281 = vmul.f32 %v182, %v231
  %v282 = vmul.f32 %v182, %v235
  %v283 = vmul.f32 %v182, %v239
  %v284 = vmul.f32 %v182, %v243
  %v285 = vmul.f32 %v182, %v247
  %v286 = vmul.f32 %v182, %v251
  %v287 = vmul.f32 %v182, %v255
  %v288 = vadd.f32 %v136, %v256
  %v289 = vadd.f32 %v137, %v257
  %v290 = vadd.f32 %v138, %v258
  %v291 = vadd.f32 %v139, %v259
  %v292 = vadd.f32 %v140, %v260
  %v293 = vadd.f32 %v141, %v261
  %v294 = vadd.f32 %v142, %v262
  %v295 = vadd.f32 %v143, %v263
  %v296 = vadd.f32 %v144, %v264
  %v297 = vadd.f32 %v145, %v265
  %v298 = vadd.f32 %v146, %v266
  %v299 = vadd.f32 %v147, %v267
  %v300 = vadd.f32 %v148, %v268
  %v301 = vadd.f32 %v149, %v269
  %v302 = vadd.f32 %v150, %v270
  %v303 = vadd.f32 %v151, %v271
  %v304 = vadd.f32 %v152, %v272
  %v305 = vadd.f32 %v153, %v273
  %v306 = vadd.f32 %v154, %v274
  %v307 = vadd.f32 %v155, %v275
  %v308 = vadd.f32 %v156, %v276
  %v309 = vadd.f32 %v157, %v277
  %v310 = vadd.f32 %v158, %v278
  %v311 = vadd.f32 %v159, %v279
  %v312 = vadd.f32 %v160, %v280
  %v313 = vadd.f32 %v161, %v281
  %v314 = vadd.f32 %v162, %v282
  %v315 = vadd.f32 %v163, %v283
  %v316 = vadd.f32 %v164, %v284
  %v317 = vadd.f32 %v165, %v285
  %v318 = vadd.f32 %v166, %v286
  %v319 = vadd.f32 %v167, %v287
  %320 = vset.pattern.permute.xlu0 2
  %321 = vperm.xlu0 %320, %v36
  %v322 = vpop.permute.xlu0 %321
  %324 = vset.pattern.permute.xlu0 2
  %325 = vperm.xlu0 %324, %v37
  %v326 = vpop.permute.xlu0 %325
  %328 = vset.pattern.permute.xlu0 2
  %329 = vperm.xlu0 %328, %v38
  %v330 = vpop.permute.xlu0 %329
  %332 = vset.pattern.permute.xlu0 2
  %333 = vperm.xlu0 %332, %v39
  %v334 = vpop.permute.xlu0 %333
  %v336 = vlaneseq
  %v337 = vshrl.u32 %v336, 7
  %v338 = vsub.s32 2, %v337
  %v339 = vrot.slane %v32, %v338
  %v340 = vlaneseq
  %v341 = vshrl.u32 %v340, 7
  %v342 = vsub.s32 6, %v341
  %v343 = vrot.slane %v32, %v342
  %v344 = vlaneseq
  %v345 = vshrl.u32 %v344, 7
  %v346 = vsub.s32 2, %v345
  %v347 = vrot.slane %v33, %v346
  %v348 = vlaneseq
  %v349 = vshrl.u32 %v348, 7
  %v350 = vsub.s32 6, %v349
  %v351 = vrot.slane %v33, %v350
  %v352 = vlaneseq
  %v353 = vshrl.u32 %v352, 7
  %v354 = vsub.s32 2, %v353
  %v355 = vrot.slane %v34, %v354
  %v356 = vlaneseq
  %v357 = vshrl.u32 %v356, 7
  %v358 = vsub.s32 6, %v357
  %v359 = vrot.slane %v34, %v358
  %v360 = vlaneseq
  %v361 = vshrl.u32 %v360, 7
  %v362 = vsub.s32 2, %v361
  %v363 = vrot.slane %v35, %v362
  %v364 = vlaneseq
  %v365 = vshrl.u32 %v364, 7
  %v366 = vsub.s32 6, %v365
  %v367 = vrot.slane %v35, %v366
  %v376 = vlaneseq
  %v377 = vshrl.u32 %v376, 7
  %v378 = vsub.s32 2, %v377
  %v379 = vrot.slane %v339, %v378
  %v380 = vlaneseq
  %v381 = vshrl.u32 %v380, 7
  %v382 = vsub.s32 2, %v381
  %v383 = vrot.slane %v343, %v382
  %v384 = vlaneseq
  %v385 = vshrl.u32 %v384, 7
  %v386 = vsub.s32 2, %v385
  %v387 = vrot.slane %v347, %v386
  %v388 = vlaneseq
  %v389 = vshrl.u32 %v388, 7
  %v390 = vsub.s32 2, %v389
  %v391 = vrot.slane %v351, %v390
  %v392 = vlaneseq
  %v393 = vshrl.u32 %v392, 7
  %v394 = vsub.s32 2, %v393
  %v395 = vrot.slane %v355, %v394
  %v396 = vlaneseq
  %v397 = vshrl.u32 %v396, 7
  %v398 = vsub.s32 2, %v397
  %v399 = vrot.slane %v359, %v398
  %v400 = vlaneseq
  %v401 = vshrl.u32 %v400, 7
  %v402 = vsub.s32 2, %v401
  %v403 = vrot.slane %v363, %v402
  %v404 = vlaneseq
  %v405 = vshrl.u32 %v404, 7
  %v406 = vsub.s32 2, %v405
  %v407 = vrot.slane %v367, %v406
  %v408 = vmul.f32 %v322, %v379
  %v409 = vmul.f32 %v322, %v383
  %v410 = vmul.f32 %v322, %v387
  %v411 = vmul.f32 %v322, %v391
  %v412 = vmul.f32 %v322, %v395
  %v413 = vmul.f32 %v322, %v399
  %v414 = vmul.f32 %v322, %v403
  %v415 = vmul.f32 %v322, %v407
  %v416 = vmul.f32 %v326, %v379
  %v417 = vmul.f32 %v326, %v383
  %v418 = vmul.f32 %v326, %v387
  %v419 = vmul.f32 %v326, %v391
  %v420 = vmul.f32 %v326, %v395
  %v421 = vmul.f32 %v326, %v399
  %v422 = vmul.f32 %v326, %v403
  %v423 = vmul.f32 %v326, %v407
  %v424 = vmul.f32 %v330, %v379
  %v425 = vmul.f32 %v330, %v383
  %v426 = vmul.f32 %v330, %v387
  %v427 = vmul.f32 %v330, %v391
  %v428 = vmul.f32 %v330, %v395
  %v429 = vmul.f32 %v330, %v399
  %v430 = vmul.f32 %v330, %v403
  %v431 = vmul.f32 %v330, %v407
  %v432 = vmul.f32 %v334, %v379
  %v433 = vmul.f32 %v334, %v383
  %v434 = vmul.f32 %v334, %v387
  %v435 = vmul.f32 %v334, %v391
  %v436 = vmul.f32 %v334, %v395
  %v437 = vmul.f32 %v334, %v399
  %v438 = vmul.f32 %v334, %v403
  %v439 = vmul.f32 %v334, %v407
  %v440 = vadd.f32 %v288, %v408
  %v441 = vadd.f32 %v289, %v409
  %v442 = vadd.f32 %v290, %v410
  %v443 = vadd.f32 %v291, %v411
  %v444 = vadd.f32 %v292, %v412
  %v445 = vadd.f32 %v293, %v413
  %v446 = vadd.f32 %v294, %v414
  %v447 = vadd.f32 %v295, %v415
  %v448 = vadd.f32 %v296, %v416
  %v449 = vadd.f32 %v297, %v417
  %v450 = vadd.f32 %v298, %v418
  %v451 = vadd.f32 %v299, %v419
  %v452 = vadd.f32 %v300, %v420
  %v453 = vadd.f32 %v301, %v421
  %v454 = vadd.f32 %v302, %v422
  %v455 = vadd.f32 %v303, %v423
  %v456 = vadd.f32 %v304, %v424
  %v457 = vadd.f32 %v305, %v425
  %v458 = vadd.f32 %v306, %v426
  %v459 = vadd.f32 %v307, %v427
  %v460 = vadd.f32 %v308, %v428
  %v461 = vadd.f32 %v309, %v429
  %v462 = vadd.f32 %v310, %v430
  %v463 = vadd.f32 %v311, %v431
  %v464 = vadd.f32 %v312, %v432
  %v465 = vadd.f32 %v313, %v433
  %v466 = vadd.f32 %v314, %v434
  %v467 = vadd.f32 %v315, %v435
  %v468 = vadd.f32 %v316, %v436
  %v469 = vadd.f32 %v317, %v437
  %v470 = vadd.f32 %v318, %v438
  %v471 = vadd.f32 %v319, %v439
  %v472 = vld [vmem:[%s2] sm:$0xff]
  %v473 = vld [vmem:[%s2 + $0x8] sm:$0xff]
  %v474 = vld [vmem:[%s2 + $0x10] sm:$0xff]
  %v475 = vld [vmem:[%s2 + $0x18] sm:$0xff]
  %477 = vset.pattern.permute.xlu0 0
  %478 = vperm.xlu0 %477, %v472
  %v479 = vpop.permute.xlu0 %478
  %482 = vset.pattern.permute.xlu0 0
  %483 = vperm.xlu0 %482, %v473
  %v484 = vpop.permute.xlu0 %483
  %487 = vset.pattern.permute.xlu0 0
  %488 = vperm.xlu0 %487, %v474
  %v489 = vpop.permute.xlu0 %488
  %492 = vset.pattern.permute.xlu0 0
  %493 = vperm.xlu0 %492, %v475
  %v494 = vpop.permute.xlu0 %493
  %v496 = vadd.f32 %v440, %v479
  %v497 = vadd.f32 %v441, %v479
  %v498 = vadd.f32 %v442, %v479
  %v499 = vadd.f32 %v443, %v479
  %v500 = vadd.f32 %v444, %v479
  %v501 = vadd.f32 %v445, %v479
  %v502 = vadd.f32 %v446, %v479
  %v503 = vadd.f32 %v447, %v479
  %v504 = vadd.f32 %v448, %v484
  %v505 = vadd.f32 %v449, %v484
  %v506 = vadd.f32 %v450, %v484
  %v507 = vadd.f32 %v451, %v484
  %v508 = vadd.f32 %v452, %v484
  %v509 = vadd.f32 %v453, %v484
  %v510 = vadd.f32 %v454, %v484
  %v511 = vadd.f32 %v455, %v484
  %v512 = vadd.f32 %v456, %v489
  %v513 = vadd.f32 %v457, %v489
  %v514 = vadd.f32 %v458, %v489
  %v515 = vadd.f32 %v459, %v489
  %v516 = vadd.f32 %v460, %v489
  %v517 = vadd.f32 %v461, %v489
  %v518 = vadd.f32 %v462, %v489
  %v519 = vadd.f32 %v463, %v489
  %v520 = vadd.f32 %v464, %v494
  %v521 = vadd.f32 %v465, %v494
  %v522 = vadd.f32 %v466, %v494
  %v523 = vadd.f32 %v467, %v494
  %v524 = vadd.f32 %v468, %v494
  %v525 = vadd.f32 %v469, %v494
  %v526 = vadd.f32 %v470, %v494
  %v527 = vadd.f32 %v471, %v494
  %v528 = vld [vmem:[%s3] sm:$0xff]
  %v529 = vld [vmem:[%s3 + $0x8] sm:$0xff]
  %v530 = vld [vmem:[%s3 + $0x10] sm:$0xff]
  %v531 = vld [vmem:[%s3 + $0x18] sm:$0xff]
  %v532 = vld [vmem:[%s4] sm:$0xff]
  %v533 = vld [vmem:[%s4 + $0x8] sm:$0xff]
  %v534 = vld [vmem:[%s4 + $0x10] sm:$0xff]
  %v535 = vld [vmem:[%s4 + $0x18] sm:$0xff]
  %v536 = vadd.f32 %v496, %v504
  %v537 = vadd.f32 %v536, %v512
  %v538 = vadd.f32 %v537, %v520
  %v539 = vrot.slane %v538, 4
  %v540 = vadd.f32 %v538, %v539
  %v541 = vrot.slane %v540, 2
  %v542 = vadd.f32 %v540, %v541
  %v543 = vrot.slane %v542, 1
  %v544 = vadd.f32 %v542, %v543
  %v545 = vadd.f32 %v497, %v505
  %v546 = vadd.f32 %v545, %v513
  %v547 = vadd.f32 %v546, %v521
  %v548 = vrot.slane %v547, 4
  %v549 = vadd.f32 %v547, %v548
  %v550 = vrot.slane %v549, 2
  %v551 = vadd.f32 %v549, %v550
  %v552 = vrot.slane %v551, 1
  %v553 = vadd.f32 %v551, %v552
  %v554 = vadd.f32 %v498, %v506
  %v555 = vadd.f32 %v554, %v514
  %v556 = vadd.f32 %v555, %v522
  %v557 = vrot.slane %v556, 4
  %v558 = vadd.f32 %v556, %v557
  %v559 = vrot.slane %v558, 2
  %v560 = vadd.f32 %v558, %v559
  %v561 = vrot.slane %v560, 1
  %v562 = vadd.f32 %v560, %v561
  %v563 = vadd.f32 %v499, %v507
  %v564 = vadd.f32 %v563, %v515
  %v565 = vadd.f32 %v564, %v523
  %v566 = vrot.slane %v565, 4
  %v567 = vadd.f32 %v565, %v566
  %v568 = vrot.slane %v567, 2
  %v569 = vadd.f32 %v567, %v568
  %v570 = vrot.slane %v569, 1
  %v571 = vadd.f32 %v569, %v570
  %v572 = vadd.f32 %v500, %v508
  %v573 = vadd.f32 %v572, %v516
  %v574 = vadd.f32 %v573, %v524
  %v575 = vrot.slane %v574, 4
  %v576 = vadd.f32 %v574, %v575
  %v577 = vrot.slane %v576, 2
  %v578 = vadd.f32 %v576, %v577
  %v579 = vrot.slane %v578, 1
  %v580 = vadd.f32 %v578, %v579
  %v581 = vadd.f32 %v501, %v509
  %v582 = vadd.f32 %v581, %v517
  %v583 = vadd.f32 %v582, %v525
  %v584 = vrot.slane %v583, 4
  %v585 = vadd.f32 %v583, %v584
  %v586 = vrot.slane %v585, 2
  %v587 = vadd.f32 %v585, %v586
  %v588 = vrot.slane %v587, 1
  %v589 = vadd.f32 %v587, %v588
  %v590 = vadd.f32 %v502, %v510
  %v591 = vadd.f32 %v590, %v518
  %v592 = vadd.f32 %v591, %v526
  %v593 = vrot.slane %v592, 4
  %v594 = vadd.f32 %v592, %v593
  %v595 = vrot.slane %v594, 2
  %v596 = vadd.f32 %v594, %v595
  %v597 = vrot.slane %v596, 1
  %v598 = vadd.f32 %v596, %v597
  %v599 = vadd.f32 %v503, %v511
  %v600 = vadd.f32 %v599, %v519
  %v601 = vadd.f32 %v600, %v527
  %v602 = vrot.slane %v601, 4
  %v603 = vadd.f32 %v601, %v602
  %v604 = vrot.slane %v603, 2
  %v605 = vadd.f32 %v603, %v604
  %v606 = vrot.slane %v605, 1
  %v607 = vadd.f32 %v605, %v606
  %v608 = vrcp.pop 32.0
  %v609 = vmul.f32 %v544, %v608
  %v610 = vmul.f32 %v553, %v608
  %v611 = vmul.f32 %v562, %v608
  %v612 = vmul.f32 %v571, %v608
  %v613 = vmul.f32 %v580, %v608
  %v614 = vmul.f32 %v589, %v608
  %v615 = vmul.f32 %v598, %v608
  %v616 = vmul.f32 %v607, %v608
  %v617 = vsub.f32 %v496, %v609
  %v618 = vsub.f32 %v497, %v610
  %v619 = vsub.f32 %v498, %v611
  %v620 = vsub.f32 %v499, %v612
  %v621 = vsub.f32 %v500, %v613
  %v622 = vsub.f32 %v501, %v614
  %v623 = vsub.f32 %v502, %v615
  %v624 = vsub.f32 %v503, %v616
  %v625 = vsub.f32 %v504, %v609
  %v626 = vsub.f32 %v505, %v610
  %v627 = vsub.f32 %v506, %v611
  %v628 = vsub.f32 %v507, %v612
  %v629 = vsub.f32 %v508, %v613
  %v630 = vsub.f32 %v509, %v614
  %v631 = vsub.f32 %v510, %v615
  %v632 = vsub.f32 %v511, %v616
  %v633 = vsub.f32 %v512, %v609
  %v634 = vsub.f32 %v513, %v610
  %v635 = vsub.f32 %v514, %v611
  %v636 = vsub.f32 %v515, %v612
  %v637 = vsub.f32 %v516, %v613
  %v638 = vsub.f32 %v517, %v614
  %v639 = vsub.f32 %v518, %v615
  %v640 = vsub.f32 %v519, %v616
  %v641 = vsub.f32 %v520, %v609
  %v642 = vsub.f32 %v521, %v610
  %v643 = vsub.f32 %v522, %v611
  %v644 = vsub.f32 %v523, %v612
  %v645 = vsub.f32 %v524, %v613
  %v646 = vsub.f32 %v525, %v614
  %v647 = vsub.f32 %v526, %v615
  %v648 = vsub.f32 %v527, %v616
  %v649 = vmul.f32 %v617, %v617
  %v650 = vmul.f32 %v618, %v618
  %v651 = vmul.f32 %v619, %v619
  %v652 = vmul.f32 %v620, %v620
  %v653 = vmul.f32 %v621, %v621
  %v654 = vmul.f32 %v622, %v622
  %v655 = vmul.f32 %v623, %v623
  %v656 = vmul.f32 %v624, %v624
  %v657 = vmul.f32 %v625, %v625
  %v658 = vmul.f32 %v626, %v626
  %v659 = vmul.f32 %v627, %v627
  %v660 = vmul.f32 %v628, %v628
  %v661 = vmul.f32 %v629, %v629
  %v662 = vmul.f32 %v630, %v630
  %v663 = vmul.f32 %v631, %v631
  %v664 = vmul.f32 %v632, %v632
  %v665 = vmul.f32 %v633, %v633
  %v666 = vmul.f32 %v634, %v634
  %v667 = vmul.f32 %v635, %v635
  %v668 = vmul.f32 %v636, %v636
  %v669 = vmul.f32 %v637, %v637
  %v670 = vmul.f32 %v638, %v638
  %v671 = vmul.f32 %v639, %v639
  %v672 = vmul.f32 %v640, %v640
  %v673 = vmul.f32 %v641, %v641
  %v674 = vmul.f32 %v642, %v642
  %v675 = vmul.f32 %v643, %v643
  %v676 = vmul.f32 %v644, %v644
  %v677 = vmul.f32 %v645, %v645
  %v678 = vmul.f32 %v646, %v646
  %v679 = vmul.f32 %v647, %v647
  %v680 = vmul.f32 %v648, %v648
  %v681 = vadd.f32 %v649, %v657
  %v682 = vadd.f32 %v681, %v665
  %v683 = vadd.f32 %v682, %v673
  %v684 = vrot.slane %v683, 4
  %v685 = vadd.f32 %v683, %v684
  %v686 = vrot.slane %v685, 2
  %v687 = vadd.f32 %v685, %v686
  %v688 = vrot.slane %v687, 1
  %v689 = vadd.f32 %v687, %v688
  %v690 = vadd.f32 %v650, %v658
  %v691 = vadd.f32 %v690, %v666
  %v692 = vadd.f32 %v691, %v674
  %v693 = vrot.slane %v692, 4
  %v694 = vadd.f32 %v692, %v693
  %v695 = vrot.slane %v694, 2
  %v696 = vadd.f32 %v694, %v695
  %v697 = vrot.slane %v696, 1
  %v698 = vadd.f32 %v696, %v697
  %v699 = vadd.f32 %v651, %v659
  %v700 = vadd.f32 %v699, %v667
  %v701 = vadd.f32 %v700, %v675
  %v702 = vrot.slane %v701, 4
  %v703 = vadd.f32 %v701, %v702
  %v704 = vrot.slane %v703, 2
  %v705 = vadd.f32 %v703, %v704
  %v706 = vrot.slane %v705, 1
  %v707 = vadd.f32 %v705, %v706
  %v708 = vadd.f32 %v652, %v660
  %v709 = vadd.f32 %v708, %v668
  %v710 = vadd.f32 %v709, %v676
  %v711 = vrot.slane %v710, 4
  %v712 = vadd.f32 %v710, %v711
  %v713 = vrot.slane %v712, 2
  %v714 = vadd.f32 %v712, %v713
  %v715 = vrot.slane %v714, 1
  %v716 = vadd.f32 %v714, %v715
  %v717 = vadd.f32 %v653, %v661
  %v718 = vadd.f32 %v717, %v669
  %v719 = vadd.f32 %v718, %v677
  %v720 = vrot.slane %v719, 4
  %v721 = vadd.f32 %v719, %v720
  %v722 = vrot.slane %v721, 2
  %v723 = vadd.f32 %v721, %v722
  %v724 = vrot.slane %v723, 1
  %v725 = vadd.f32 %v723, %v724
  %v726 = vadd.f32 %v654, %v662
  %v727 = vadd.f32 %v726, %v670
  %v728 = vadd.f32 %v727, %v678
  %v729 = vrot.slane %v728, 4
  %v730 = vadd.f32 %v728, %v729
  %v731 = vrot.slane %v730, 2
  %v732 = vadd.f32 %v730, %v731
  %v733 = vrot.slane %v732, 1
  %v734 = vadd.f32 %v732, %v733
  %v735 = vadd.f32 %v655, %v663
  %v736 = vadd.f32 %v735, %v671
  %v737 = vadd.f32 %v736, %v679
  %v738 = vrot.slane %v737, 4
  %v739 = vadd.f32 %v737, %v738
  %v740 = vrot.slane %v739, 2
  %v741 = vadd.f32 %v739, %v740
  %v742 = vrot.slane %v741, 1
  %v743 = vadd.f32 %v741, %v742
  %v744 = vadd.f32 %v656, %v664
  %v745 = vadd.f32 %v744, %v672
  %v746 = vadd.f32 %v745, %v680
  %v747 = vrot.slane %v746, 4
  %v748 = vadd.f32 %v746, %v747
  %v749 = vrot.slane %v748, 2
  %v750 = vadd.f32 %v748, %v749
  %v751 = vrot.slane %v750, 1
  %v752 = vadd.f32 %v750, %v751
  %v753 = vmul.f32 %v689, %v608
  %v754 = vmul.f32 %v698, %v608
  %v755 = vmul.f32 %v707, %v608
  %v756 = vmul.f32 %v716, %v608
  %v757 = vmul.f32 %v725, %v608
  %v758 = vmul.f32 %v734, %v608
  %v759 = vmul.f32 %v743, %v608
  %v760 = vmul.f32 %v752, %v608
  %v761 = vadd.f32 %v753, 1e-05
  %v762 = vadd.f32 %v754, 1e-05
  %v763 = vadd.f32 %v755, 1e-05
  %v764 = vadd.f32 %v756, 1e-05
  %v765 = vadd.f32 %v757, 1e-05
  %v766 = vadd.f32 %v758, 1e-05
  %v767 = vadd.f32 %v759, 1e-05
  %v768 = vadd.f32 %v760, 1e-05
  %v769 = vrsqrt.pop %v761
  %v770 = vrsqrt.pop %v762
  %v771 = vrsqrt.pop %v763
  %v772 = vrsqrt.pop %v764
  %v773 = vrsqrt.pop %v765
  %v774 = vrsqrt.pop %v766
  %v775 = vrsqrt.pop %v767
  %v776 = vrsqrt.pop %v768
  %v777 = vmul.f32 %v617, %v769
  %v778 = vmul.f32 %v618, %v770
  %v779 = vmul.f32 %v619, %v771
  %v780 = vmul.f32 %v620, %v772
  %v781 = vmul.f32 %v621, %v773
  %v782 = vmul.f32 %v622, %v774
  %v783 = vmul.f32 %v623, %v775
  %v784 = vmul.f32 %v624, %v776
  %v785 = vmul.f32 %v625, %v769
  %v786 = vmul.f32 %v626, %v770
  %v787 = vmul.f32 %v627, %v771
  %v788 = vmul.f32 %v628, %v772
  %v789 = vmul.f32 %v629, %v773
  %v790 = vmul.f32 %v630, %v774
  %v791 = vmul.f32 %v631, %v775
  %v792 = vmul.f32 %v632, %v776
  %v793 = vmul.f32 %v633, %v769
  %v794 = vmul.f32 %v634, %v770
  %v795 = vmul.f32 %v635, %v771
  %v796 = vmul.f32 %v636, %v772
  %v797 = vmul.f32 %v637, %v773
  %v798 = vmul.f32 %v638, %v774
  %v799 = vmul.f32 %v639, %v775
  %v800 = vmul.f32 %v640, %v776
  %v801 = vmul.f32 %v641, %v769
  %v802 = vmul.f32 %v642, %v770
  %v803 = vmul.f32 %v643, %v771
  %v804 = vmul.f32 %v644, %v772
  %v805 = vmul.f32 %v645, %v773
  %v806 = vmul.f32 %v646, %v774
  %v807 = vmul.f32 %v647, %v775
  %v808 = vmul.f32 %v648, %v776
  %810 = vset.pattern.permute.xlu0 0
  %811 = vperm.xlu0 %810, %v528
  %v812 = vpop.permute.xlu0 %811
  %815 = vset.pattern.permute.xlu0 0
  %816 = vperm.xlu0 %815, %v529
  %v817 = vpop.permute.xlu0 %816
  %820 = vset.pattern.permute.xlu0 0
  %821 = vperm.xlu0 %820, %v530
  %v822 = vpop.permute.xlu0 %821
  %825 = vset.pattern.permute.xlu0 0
  %826 = vperm.xlu0 %825, %v531
  %v827 = vpop.permute.xlu0 %826
  %v829 = vmul.f32 %v777, %v812
  %v830 = vmul.f32 %v778, %v812
  %v831 = vmul.f32 %v779, %v812
  %v832 = vmul.f32 %v780, %v812
  %v833 = vmul.f32 %v781, %v812
  %v834 = vmul.f32 %v782, %v812
  %v835 = vmul.f32 %v783, %v812
  %v836 = vmul.f32 %v784, %v812
  %v837 = vmul.f32 %v785, %v817
  %v838 = vmul.f32 %v786, %v817
  %v839 = vmul.f32 %v787, %v817
  %v840 = vmul.f32 %v788, %v817
  %v841 = vmul.f32 %v789, %v817
  %v842 = vmul.f32 %v790, %v817
  %v843 = vmul.f32 %v791, %v817
  %v844 = vmul.f32 %v792, %v817
  %v845 = vmul.f32 %v793, %v822
  %v846 = vmul.f32 %v794, %v822
  %v847 = vmul.f32 %v795, %v822
  %v848 = vmul.f32 %v796, %v822
  %v849 = vmul.f32 %v797, %v822
  %v850 = vmul.f32 %v798, %v822
  %v851 = vmul.f32 %v799, %v822
  %v852 = vmul.f32 %v800, %v822
  %v853 = vmul.f32 %v801, %v827
  %v854 = vmul.f32 %v802, %v827
  %v855 = vmul.f32 %v803, %v827
  %v856 = vmul.f32 %v804, %v827
  %v857 = vmul.f32 %v805, %v827
  %v858 = vmul.f32 %v806, %v827
  %v859 = vmul.f32 %v807, %v827
  %v860 = vmul.f32 %v808, %v827
  %862 = vset.pattern.permute.xlu0 0
  %863 = vperm.xlu0 %862, %v532
  %v864 = vpop.permute.xlu0 %863
  %867 = vset.pattern.permute.xlu0 0
  %868 = vperm.xlu0 %867, %v533
  %v869 = vpop.permute.xlu0 %868
  %872 = vset.pattern.permute.xlu0 0
  %873 = vperm.xlu0 %872, %v534
  %v874 = vpop.permute.xlu0 %873
  %877 = vset.pattern.permute.xlu0 0
  %878 = vperm.xlu0 %877, %v535
  %v879 = vpop.permute.xlu0 %878
  %v881 = vadd.f32 %v829, %v864
  %v882 = vadd.f32 %v830, %v864
  %v883 = vadd.f32 %v831, %v864
  %v884 = vadd.f32 %v832, %v864
  %v885 = vadd.f32 %v833, %v864
  %v886 = vadd.f32 %v834, %v864
  %v887 = vadd.f32 %v835, %v864
  %v888 = vadd.f32 %v836, %v864
  %v889 = vadd.f32 %v837, %v869
  %v890 = vadd.f32 %v838, %v869
  %v891 = vadd.f32 %v839, %v869
  %v892 = vadd.f32 %v840, %v869
  %v893 = vadd.f32 %v841, %v869
  %v894 = vadd.f32 %v842, %v869
  %v895 = vadd.f32 %v843, %v869
  %v896 = vadd.f32 %v844, %v869
  %v897 = vadd.f32 %v845, %v874
  %v898 = vadd.f32 %v846, %v874
  %v899 = vadd.f32 %v847, %v874
  %v900 = vadd.f32 %v848, %v874
  %v901 = vadd.f32 %v849, %v874
  %v902 = vadd.f32 %v850, %v874
  %v903 = vadd.f32 %v851, %v874
  %v904 = vadd.f32 %v852, %v874
  %v905 = vadd.f32 %v853, %v879
  %v906 = vadd.f32 %v854, %v879
  %v907 = vadd.f32 %v855, %v879
  %v908 = vadd.f32 %v856, %v879
  %v909 = vadd.f32 %v857, %v879
  %v910 = vadd.f32 %v858, %v879
  %v911 = vadd.f32 %v859, %v879
  %v912 = vadd.f32 %v860, %v879
  %v913 = vmax.f32 %v881, 0.0
  %v914 = vmax.f32 %v882, 0.0
  %v915 = vmax.f32 %v883, 0.0
  %v916 = vmax.f32 %v884, 0.0
  %v917 = vmax.f32 %v885, 0.0
  %v918 = vmax.f32 %v886, 0.0
  %v919 = vmax.f32 %v887, 0.0
  %v920 = vmax.f32 %v888, 0.0
  %v921 = vmax.f32 %v889, 0.0
  %v922 = vmax.f32 %v890, 0.0
  %v923 = vmax.f32 %v891, 0.0
  %v924 = vmax.f32 %v892, 0.0
  %v925 = vmax.f32 %v893, 0.0
  %v926 = vmax.f32 %v894, 0.0
  %v927 = vmax.f32 %v895, 0.0
  %v928 = vmax.f32 %v896, 0.0
  %v929 = vmax.f32 %v897, 0.0
  %v930 = vmax.f32 %v898, 0.0
  %v931 = vmax.f32 %v899, 0.0
  %v932 = vmax.f32 %v900, 0.0
  %v933 = vmax.f32 %v901, 0.0
  %v934 = vmax.f32 %v902, 0.0
  %v935 = vmax.f32 %v903, 0.0
  %v936 = vmax.f32 %v904, 0.0
  %v937 = vmax.f32 %v905, 0.0
  %v938 = vmax.f32 %v906, 0.0
  %v939 = vmax.f32 %v907, 0.0
  %v940 = vmax.f32 %v908, 0.0
  %v941 = vmax.f32 %v909, 0.0
  %v942 = vmax.f32 %v910, 0.0
  %v943 = vmax.f32 %v911, 0.0
  %v944 = vmax.f32 %v912, 0.0
  %v945 = vld [vmem:[%s5] sm:$0xff]
  %v946 = vld [vmem:[%s5 + $0x8] sm:$0xff]
  %v947 = vld [vmem:[%s5 + $0x10] sm:$0xff]
  %v948 = vld [vmem:[%s5 + $0x18] sm:$0xff]
  %v949 = vld [vmem:[%s6] sm:$0xff]
  %v950 = vld [vmem:[%s6 + $0x8] sm:$0xff]
  %v951 = vld [vmem:[%s6 + $0x10] sm:$0xff]
  %v952 = vld [vmem:[%s6 + $0x18] sm:$0xff]
  %954 = vset.pattern.permute.xlu0 0
  %955 = vperm.xlu0 %954, %v949
  %v956 = vpop.permute.xlu0 %955
  %959 = vset.pattern.permute.xlu0 0
  %960 = vperm.xlu0 %959, %v950
  %v961 = vpop.permute.xlu0 %960
  %964 = vset.pattern.permute.xlu0 0
  %965 = vperm.xlu0 %964, %v951
  %v966 = vpop.permute.xlu0 %965
  %969 = vset.pattern.permute.xlu0 0
  %970 = vperm.xlu0 %969, %v952
  %v971 = vpop.permute.xlu0 %970
  %vm973 = vcmask 261120
  %v975 = vsel %vm973, %v945, 0
  %v978 = vsel %vm973, %v946, 0
  %v981 = vsel %vm973, %v947, 0
  %v984 = vsel %vm973, %v948, 0
  %986 = vmatprep.subr.mxu0 0.0
  %987 = vmatpush1.msra.mxu0 0.0
  %988 = vmatprep.subr.mxu0 0.0
  %989 = vmatpush1.msra.mxu0 0.0
  %990 = vmatprep.subr.mxu0 0.0
  %991 = vmatpush1.msra.mxu0 0.0
  %992 = vmatprep.subr.mxu0 0.0
  %993 = vmatpush1.msra.mxu0 0.0
  %994 = vmatprep.subr.mxu0 0.0
  %995 = vmatpush1.msra.mxu0 0.0
  %996 = vmatprep.subr.mxu0 0.0
  %997 = vmatpush1.msra.mxu0 0.0
  %998 = vmatprep.subr.mxu0 0.0
  %999 = vmatpush1.msra.mxu0 0.0
  %1000 = vmatprep.subr.mxu0 0.0
  %1001 = vmatpush1.msra.mxu0 0.0
  %1002 = vmatprep.subr.mxu0 0.0
  %1003 = vmatpush1.msra.mxu0 0.0
  %1004 = vmatprep.subr.mxu0 0.0
  %1005 = vmatpush1.msra.mxu0 0.0
  %1006 = vmatprep.subr.mxu0 0.0
  %1007 = vmatpush1.msra.mxu0 0.0
  %1008 = vmatprep.subr.mxu0 0.0
  %1009 = vmatpush1.msra.mxu0 0.0
  %1010 = vmatprep.subr.mxu0 %v938
  %1011 = vmatpush1.msra.mxu0 %v937
  %1012 = vmatprep.subr.mxu0 %v930
  %1013 = vmatpush1.msra.mxu0 %v929
  %1014 = vmatprep.subr.mxu0 %v922
  %1015 = vmatpush1.msra.mxu0 %v921
  %1016 = vmatprep.subr.mxu0 %v914
  %1017 = vmatpush1.msra.mxu0 %v913
  %1018 = vmatprep.subr.mxu0 0.0
  %1019 = vmatpush2.msra.mxu0 0.0
  %1020 = vmatprep.subr.mxu0 0.0
  %1021 = vmatpush2.msra.mxu0 0.0
  %1022 = vmatprep.subr.mxu0 0.0
  %1023 = vmatpush2.msra.mxu0 0.0
  %1024 = vmatprep.subr.mxu0 0.0
  %1025 = vmatpush2.msra.mxu0 0.0
  %1026 = vmatprep.subr.mxu0 0.0
  %1027 = vmatpush2.msra.mxu0 0.0
  %1028 = vmatprep.subr.mxu0 0.0
  %1029 = vmatpush2.msra.mxu0 0.0
  %1030 = vmatprep.subr.mxu0 0.0
  %1031 = vmatpush2.msra.mxu0 0.0
  %1032 = vmatprep.subr.mxu0 0.0
  %1033 = vmatpush2.msra.mxu0 0.0
  %1034 = vmatprep.subr.mxu0 0.0
  %1035 = vmatpush2.msra.mxu0 0.0
  %1036 = vmatprep.subr.mxu0 0.0
  %1037 = vmatpush2.msra.mxu0 0.0
  %1038 = vmatprep.subr.mxu0 0.0
  %1039 = vmatpush2.msra.mxu0 0.0
  %1040 = vmatprep.subr.mxu0 0.0
  %1041 = vmatpush2.msra.mxu0 0.0
  %1042 = vmatprep.subr.mxu0 0.0
  %1043 = vmatpush2.msra.mxu0 0.0
  %1044 = vmatprep.subr.mxu0 0.0
  %1045 = vmatpush2.msra.mxu0 0.0
  %1046 = vmatprep.subr.mxu0 0.0
  %1047 = vmatpush2.msra.mxu0 0.0
  %1048 = vmatprep.subr.mxu0 0.0
  %1049 = vmatpush2.msra.mxu0 0.0
  %1050 = vmatprep.mubr.f32.mxu0 0.0
  %1051 = vmatmul.mubr.f32.gmra.mxu0 %v975
  %v1052 = vpop.f32.mrf.mxu0
  %v1053 = vadd.f32 %v956, %v1052
  %v1054 = vpop.f32.mrf.mxu0
  %v1055 = vadd.f32 %v956, %v1054
  %1056 = vmatprep.mubr.f32.mxu0 0.0
  %1057 = vmatmul.mubr.f32.gmra.mxu0 %v978
  %v1058 = vpop.f32.mrf.mxu0
  %v1059 = vadd.f32 %v961, %v1058
  %v1060 = vpop.f32.mrf.mxu0
  %v1061 = vadd.f32 %v961, %v1060
  %1062 = vmatprep.mubr.f32.mxu0 0.0
  %1063 = vmatmul.mubr.f32.gmra.mxu0 %v981
  %v1064 = vpop.f32.mrf.mxu0
  %v1065 = vadd.f32 %v966, %v1064
  %v1066 = vpop.f32.mrf.mxu0
  %v1067 = vadd.f32 %v966, %v1066
  %1068 = vmatprep.mubr.f32.mxu0 0.0
  %1069 = vmatmul.mubr.f32.gmra.mxu0 %v984
  %v1070 = vpop.f32.mrf.mxu0
  %v1071 = vadd.f32 %v971, %v1070
  %v1072 = vpop.f32.mrf.mxu0
  %v1073 = vadd.f32 %v971, %v1072
  %1074 = vdwg.mxu0
  %1075 = vmatprep.subr.mxu0 0.0
  %1076 = vmatpush1.msra.mxu0 0.0
  %1077 = vmatprep.subr.mxu0 0.0
  %1078 = vmatpush1.msra.mxu0 0.0
  %1079 = vmatprep.subr.mxu0 0.0
  %1080 = vmatpush1.msra.mxu0 0.0
  %1081 = vmatprep.subr.mxu0 0.0
  %1082 = vmatpush1.msra.mxu0 0.0
  %1083 = vmatprep.subr.mxu0 0.0
  %1084 = vmatpush1.msra.mxu0 0.0
  %1085 = vmatprep.subr.mxu0 0.0
  %1086 = vmatpush1.msra.mxu0 0.0
  %1087 = vmatprep.subr.mxu0 0.0
  %1088 = vmatpush1.msra.mxu0 0.0
  %1089 = vmatprep.subr.mxu0 0.0
  %1090 = vmatpush1.msra.mxu0 0.0
  %1091 = vmatprep.subr.mxu0 0.0
  %1092 = vmatpush1.msra.mxu0 0.0
  %1093 = vmatprep.subr.mxu0 0.0
  %1094 = vmatpush1.msra.mxu0 0.0
  %1095 = vmatprep.subr.mxu0 0.0
  %1096 = vmatpush1.msra.mxu0 0.0
  %1097 = vmatprep.subr.mxu0 0.0
  %1098 = vmatpush1.msra.mxu0 0.0
  %1099 = vmatprep.subr.mxu0 %v940
  %1100 = vmatpush1.msra.mxu0 %v939
  %1101 = vmatprep.subr.mxu0 %v932
  %1102 = vmatpush1.msra.mxu0 %v931
  %1103 = vmatprep.subr.mxu0 %v924
  %1104 = vmatpush1.msra.mxu0 %v923
  %1105 = vmatprep.subr.mxu0 %v916
  %1106 = vmatpush1.msra.mxu0 %v915
  %1107 = vmatprep.subr.mxu0 0.0
  %1108 = vmatpush2.msra.mxu0 0.0
  %1109 = vmatprep.subr.mxu0 0.0
  %1110 = vmatpush2.msra.mxu0 0.0
  %1111 = vmatprep.subr.mxu0 0.0
  %1112 = vmatpush2.msra.mxu0 0.0
  %1113 = vmatprep.subr.mxu0 0.0
  %1114 = vmatpush2.msra.mxu0 0.0
  %1115 = vmatprep.subr.mxu0 0.0
  %1116 = vmatpush2.msra.mxu0 0.0
  %1117 = vmatprep.subr.mxu0 0.0
  %1118 = vmatpush2.msra.mxu0 0.0
  %1119 = vmatprep.subr.mxu0 0.0
  %1120 = vmatpush2.msra.mxu0 0.0
  %1121 = vmatprep.subr.mxu0 0.0
  %1122 = vmatpush2.msra.mxu0 0.0
  %1123 = vmatprep.subr.mxu0 0.0
  %1124 = vmatpush2.msra.mxu0 0.0
  %1125 = vmatprep.subr.mxu0 0.0
  %1126 = vmatpush2.msra.mxu0 0.0
  %1127 = vmatprep.subr.mxu0 0.0
  %1128 = vmatpush2.msra.mxu0 0.0
  %1129 = vmatprep.subr.mxu0 0.0
  %1130 = vmatpush2.msra.mxu0 0.0
  %1131 = vmatprep.subr.mxu0 0.0
  %1132 = vmatpush2.msra.mxu0 0.0
  %1133 = vmatprep.subr.mxu0 0.0
  %1134 = vmatpush2.msra.mxu0 0.0
  %1135 = vmatprep.subr.mxu0 0.0
  %1136 = vmatpush2.msra.mxu0 0.0
  %1137 = vmatprep.subr.mxu0 0.0
  %1138 = vmatpush2.msra.mxu0 0.0
  %1139 = vmatprep.mubr.f32.mxu0 0.0
  %1140 = vmatmul.mubr.f32.gmra.mxu0 %v975
  %v1141 = vpop.f32.mrf.mxu0
  %v1142 = vadd.f32 %v956, %v1141
  %v1143 = vpop.f32.mrf.mxu0
  %v1144 = vadd.f32 %v956, %v1143
  %1145 = vmatprep.mubr.f32.mxu0 0.0
  %1146 = vmatmul.mubr.f32.gmra.mxu0 %v978
  %v1147 = vpop.f32.mrf.mxu0
  %v1148 = vadd.f32 %v961, %v1147
  %v1149 = vpop.f32.mrf.mxu0
  %v1150 = vadd.f32 %v961, %v1149
  %1151 = vmatprep.mubr.f32.mxu0 0.0
  %1152 = vmatmul.mubr.f32.gmra.mxu0 %v981
  %v1153 = vpop.f32.mrf.mxu0
  %v1154 = vadd.f32 %v966, %v1153
  %v1155 = vpop.f32.mrf.mxu0
  %v1156 = vadd.f32 %v966, %v1155
  %1157 = vmatprep.mubr.f32.mxu0 0.0
  %1158 = vmatmul.mubr.f32.gmra.mxu0 %v984
  %v1159 = vpop.f32.mrf.mxu0
  %v1160 = vadd.f32 %v971, %v1159
  %v1161 = vpop.f32.mrf.mxu0
  %v1162 = vadd.f32 %v971, %v1161
  %1163 = vdwg.mxu0
  %1164 = vmatprep.subr.mxu0 0.0
  %1165 = vmatpush1.msra.mxu0 0.0
  %1166 = vmatprep.subr.mxu0 0.0
  %1167 = vmatpush1.msra.mxu0 0.0
  %1168 = vmatprep.subr.mxu0 0.0
  %1169 = vmatpush1.msra.mxu0 0.0
  %1170 = vmatprep.subr.mxu0 0.0
  %1171 = vmatpush1.msra.mxu0 0.0
  %1172 = vmatprep.subr.mxu0 0.0
  %1173 = vmatpush1.msra.mxu0 0.0
  %1174 = vmatprep.subr.mxu0 0.0
  %1175 = vmatpush1.msra.mxu0 0.0
  %1176 = vmatprep.subr.mxu0 0.0
  %1177 = vmatpush1.msra.mxu0 0.0
  %1178 = vmatprep.subr.mxu0 0.0
  %1179 = vmatpush1.msra.mxu0 0.0
  %1180 = vmatprep.subr.mxu0 0.0
  %1181 = vmatpush1.msra.mxu0 0.0
  %1182 = vmatprep.subr.mxu0 0.0
  %1183 = vmatpush1.msra.mxu0 0.0
  %1184 = vmatprep.subr.mxu0 0.0
  %1185 = vmatpush1.msra.mxu0 0.0
  %1186 = vmatprep.subr.mxu0 0.0
  %1187 = vmatpush1.msra.mxu0 0.0
  %1188 = vmatprep.subr.mxu0 %v942
  %1189 = vmatpush1.msra.mxu0 %v941
  %1190 = vmatprep.subr.mxu0 %v934
  %1191 = vmatpush1.msra.mxu0 %v933
  %1192 = vmatprep.subr.mxu0 %v926
  %1193 = vmatpush1.msra.mxu0 %v925
  %1194 = vmatprep.subr.mxu0 %v918
  %1195 = vmatpush1.msra.mxu0 %v917
  %1196 = vmatprep.subr.mxu0 0.0
  %1197 = vmatpush2.msra.mxu0 0.0
  %1198 = vmatprep.subr.mxu0 0.0
  %1199 = vmatpush2.msra.mxu0 0.0
  %1200 = vmatprep.subr.mxu0 0.0
  %1201 = vmatpush2.msra.mxu0 0.0
  %1202 = vmatprep.subr.mxu0 0.0
  %1203 = vmatpush2.msra.mxu0 0.0
  %1204 = vmatprep.subr.mxu0 0.0
  %1205 = vmatpush2.msra.mxu0 0.0
  %1206 = vmatprep.subr.mxu0 0.0
  %1207 = vmatpush2.msra.mxu0 0.0
  %1208 = vmatprep.subr.mxu0 0.0
  %1209 = vmatpush2.msra.mxu0 0.0
  %1210 = vmatprep.subr.mxu0 0.0
  %1211 = vmatpush2.msra.mxu0 0.0
  %1212 = vmatprep.subr.mxu0 0.0
  %1213 = vmatpush2.msra.mxu0 0.0
  %1214 = vmatprep.subr.mxu0 0.0
  %1215 = vmatpush2.msra.mxu0 0.0
  %1216 = vmatprep.subr.mxu0 0.0
  %1217 = vmatpush2.msra.mxu0 0.0
  %1218 = vmatprep.subr.mxu0 0.0
  %1219 = vmatpush2.msra.mxu0 0.0
  %1220 = vmatprep.subr.mxu0 0.0
  %1221 = vmatpush2.msra.mxu0 0.0
  %1222 = vmatprep.subr.mxu0 0.0
  %1223 = vmatpush2.msra.mxu0 0.0
  %1224 = vmatprep.subr.mxu0 0.0
  %1225 = vmatpush2.msra.mxu0 0.0
  %1226 = vmatprep.subr.mxu0 0.0
  %1227 = vmatpush2.msra.mxu0 0.0
  %1228 = vmatprep.mubr.f32.mxu0 0.0
  %1229 = vmatmul.mubr.f32.gmra.mxu0 %v975
  %v1230 = vpop.f32.mrf.mxu0
  %v1231 = vadd.f32 %v956, %v1230
  %v1232 = vpop.f32.mrf.mxu0
  %v1233 = vadd.f32 %v956, %v1232
  %1234 = vmatprep.mubr.f32.mxu0 0.0
  %1235 = vmatmul.mubr.f32.gmra.mxu0 %v978
  %v1236 = vpop.f32.mrf.mxu0
  %v1237 = vadd.f32 %v961, %v1236
  %v1238 = vpop.f32.mrf.mxu0
  %v1239 = vadd.f32 %v961, %v1238
  %1240 = vmatprep.mubr.f32.mxu0 0.0
  %1241 = vmatmul.mubr.f32.gmra.mxu0 %v981
  %v1242 = vpop.f32.mrf.mxu0
  %v1243 = vadd.f32 %v966, %v1242
  %v1244 = vpop.f32.mrf.mxu0
  %v1245 = vadd.f32 %v966, %v1244
  %1246 = vmatprep.mubr.f32.mxu0 0.0
  %1247 = vmatmul.mubr.f32.gmra.mxu0 %v984
  %v1248 = vpop.f32.mrf.mxu0
  %v1249 = vadd.f32 %v971, %v1248
  %v1250 = vpop.f32.mrf.mxu0
  %v1251 = vadd.f32 %v971, %v1250
  %1252 = vdwg.mxu0
  %1253 = vmatprep.subr.mxu0 0.0
  %1254 = vmatpush1.msra.mxu0 0.0
  %1255 = vmatprep.subr.mxu0 0.0
  %1256 = vmatpush1.msra.mxu0 0.0
  %1257 = vmatprep.subr.mxu0 0.0
  %1258 = vmatpush1.msra.mxu0 0.0
  %1259 = vmatprep.subr.mxu0 0.0
  %1260 = vmatpush1.msra.mxu0 0.0
  %1261 = vmatprep.subr.mxu0 0.0
  %1262 = vmatpush1.msra.mxu0 0.0
  %1263 = vmatprep.subr.mxu0 0.0
  %1264 = vmatpush1.msra.mxu0 0.0
  %1265 = vmatprep.subr.mxu0 0.0
  %1266 = vmatpush1.msra.mxu0 0.0
  %1267 = vmatprep.subr.mxu0 0.0
  %1268 = vmatpush1.msra.mxu0 0.0
  %1269 = vmatprep.subr.mxu0 0.0
  %1270 = vmatpush1.msra.mxu0 0.0
  %1271 = vmatprep.subr.mxu0 0.0
  %1272 = vmatpush1.msra.mxu0 0.0
  %1273 = vmatprep.subr.mxu0 0.0
  %1274 = vmatpush1.msra.mxu0 0.0
  %1275 = vmatprep.subr.mxu0 0.0
  %1276 = vmatpush1.msra.mxu0 0.0
  %1277 = vmatprep.subr.mxu0 %v944
  %1278 = vmatpush1.msra.mxu0 %v943
  %1279 = vmatprep.subr.mxu0 %v936
  %1280 = vmatpush1.msra.mxu0 %v935
  %1281 = vmatprep.subr.mxu0 %v928
  %1282 = vmatpush1.msra.mxu0 %v927
  %1283 = vmatprep.subr.mxu0 %v920
  %1284 = vmatpush1.msra.mxu0 %v919
  %1285 = vmatprep.subr.mxu0 0.0
  %1286 = vmatpush2.msra.mxu0 0.0
  %1287 = vmatprep.subr.mxu0 0.0
  %1288 = vmatpush2.msra.mxu0 0.0
  %1289 = vmatprep.subr.mxu0 0.0
  %1290 = vmatpush2.msra.mxu0 0.0
  %1291 = vmatprep.subr.mxu0 0.0
  %1292 = vmatpush2.msra.mxu0 0.0
  %1293 = vmatprep.subr.mxu0 0.0
  %1294 = vmatpush2.msra.mxu0 0.0
  %1295 = vmatprep.subr.mxu0 0.0
  %1296 = vmatpush2.msra.mxu0 0.0
  %1297 = vmatprep.subr.mxu0 0.0
  %1298 = vmatpush2.msra.mxu0 0.0
  %1299 = vmatprep.subr.mxu0 0.0
  %1300 = vmatpush2.msra.mxu0 0.0
  %1301 = vmatprep.subr.mxu0 0.0
  %1302 = vmatpush2.msra.mxu0 0.0
  %1303 = vmatprep.subr.mxu0 0.0
  %1304 = vmatpush2.msra.mxu0 0.0
  %1305 = vmatprep.subr.mxu0 0.0
  %1306 = vmatpush2.msra.mxu0 0.0
  %1307 = vmatprep.subr.mxu0 0.0
  %1308 = vmatpush2.msra.mxu0 0.0
  %1309 = vmatprep.subr.mxu0 0.0
  %1310 = vmatpush2.msra.mxu0 0.0
  %1311 = vmatprep.subr.mxu0 0.0
  %1312 = vmatpush2.msra.mxu0 0.0
  %1313 = vmatprep.subr.mxu0 0.0
  %1314 = vmatpush2.msra.mxu0 0.0
  %1315 = vmatprep.subr.mxu0 0.0
  %1316 = vmatpush2.msra.mxu0 0.0
  %1317 = vmatprep.mubr.f32.mxu0 0.0
  %1318 = vmatmul.mubr.f32.gmra.mxu0 %v975
  %v1319 = vpop.f32.mrf.mxu0
  %v1320 = vadd.f32 %v956, %v1319
  %v1321 = vpop.f32.mrf.mxu0
  %v1322 = vadd.f32 %v956, %v1321
  %1323 = vmatprep.mubr.f32.mxu0 0.0
  %1324 = vmatmul.mubr.f32.gmra.mxu0 %v978
  %v1325 = vpop.f32.mrf.mxu0
  %v1326 = vadd.f32 %v961, %v1325
  %v1327 = vpop.f32.mrf.mxu0
  %v1328 = vadd.f32 %v961, %v1327
  %1329 = vmatprep.mubr.f32.mxu0 0.0
  %1330 = vmatmul.mubr.f32.gmra.mxu0 %v981
  %v1331 = vpop.f32.mrf.mxu0
  %v1332 = vadd.f32 %v966, %v1331
  %v1333 = vpop.f32.mrf.mxu0
  %v1334 = vadd.f32 %v966, %v1333
  %1335 = vmatprep.mubr.f32.mxu0 0.0
  %1336 = vmatmul.mubr.f32.gmra.mxu0 %v984
  %v1337 = vpop.f32.mrf.mxu0
  %v1338 = vadd.f32 %v971, %v1337
  %v1339 = vpop.f32.mrf.mxu0
  %v1340 = vadd.f32 %v971, %v1339
  %1341 = vdwg.mxu0
  %v1342 = vld [vmem:[%s7] sm:$0xff]
  %v1343 = vld [vmem:[%s7 + $0x8] sm:$0xff]
  %v1344 = vld [vmem:[%s7 + $0x10] sm:$0xff]
  %v1345 = vld [vmem:[%s7 + $0x18] sm:$0xff]
  %v1346 = vld [vmem:[%s8] sm:$0xff]
  %v1347 = vld [vmem:[%s8 + $0x8] sm:$0xff]
  %v1348 = vld [vmem:[%s8 + $0x10] sm:$0xff]
  %v1349 = vld [vmem:[%s8 + $0x18] sm:$0xff]
  %v1350 = vadd.f32 %v1053, %v1059
  %v1351 = vadd.f32 %v1350, %v1065
  %v1352 = vadd.f32 %v1351, %v1071
  %v1353 = vrot.slane %v1352, 4
  %v1354 = vadd.f32 %v1352, %v1353
  %v1355 = vrot.slane %v1354, 2
  %v1356 = vadd.f32 %v1354, %v1355
  %v1357 = vrot.slane %v1356, 1
  %v1358 = vadd.f32 %v1356, %v1357
  %v1359 = vadd.f32 %v1055, %v1061
  %v1360 = vadd.f32 %v1359, %v1067
  %v1361 = vadd.f32 %v1360, %v1073
  %v1362 = vrot.slane %v1361, 4
  %v1363 = vadd.f32 %v1361, %v1362
  %v1364 = vrot.slane %v1363, 2
  %v1365 = vadd.f32 %v1363, %v1364
  %v1366 = vrot.slane %v1365, 1
  %v1367 = vadd.f32 %v1365, %v1366
  %v1368 = vadd.f32 %v1142, %v1148
  %v1369 = vadd.f32 %v1368, %v1154
  %v1370 = vadd.f32 %v1369, %v1160
  %v1371 = vrot.slane %v1370, 4
  %v1372 = vadd.f32 %v1370, %v1371
  %v1373 = vrot.slane %v1372, 2
  %v1374 = vadd.f32 %v1372, %v1373
  %v1375 = vrot.slane %v1374, 1
  %v1376 = vadd.f32 %v1374, %v1375
  %v1377 = vadd.f32 %v1144, %v1150
  %v1378 = vadd.f32 %v1377, %v1156
  %v1379 = vadd.f32 %v1378, %v1162
  %v1380 = vrot.slane %v1379, 4
  %v1381 = vadd.f32 %v1379, %v1380
  %v1382 = vrot.slane %v1381, 2
  %v1383 = vadd.f32 %v1381, %v1382
  %v1384 = vrot.slane %v1383, 1
  %v1385 = vadd.f32 %v1383, %v1384
  %v1386 = vadd.f32 %v1231, %v1237
  %v1387 = vadd.f32 %v1386, %v1243
  %v1388 = vadd.f32 %v1387, %v1249
  %v1389 = vrot.slane %v1388, 4
  %v1390 = vadd.f32 %v1388, %v1389
  %v1391 = vrot.slane %v1390, 2
  %v1392 = vadd.f32 %v1390, %v1391
  %v1393 = vrot.slane %v1392, 1
  %v1394 = vadd.f32 %v1392, %v1393
  %v1395 = vadd.f32 %v1233, %v1239
  %v1396 = vadd.f32 %v1395, %v1245
  %v1397 = vadd.f32 %v1396, %v1251
  %v1398 = vrot.slane %v1397, 4
  %v1399 = vadd.f32 %v1397, %v1398
  %v1400 = vrot.slane %v1399, 2
  %v1401 = vadd.f32 %v1399, %v1400
  %v1402 = vrot.slane %v1401, 1
  %v1403 = vadd.f32 %v1401, %v1402
  %v1404 = vadd.f32 %v1320, %v1326
  %v1405 = vadd.f32 %v1404, %v1332
  %v1406 = vadd.f32 %v1405, %v1338
  %v1407 = vrot.slane %v1406, 4
  %v1408 = vadd.f32 %v1406, %v1407
  %v1409 = vrot.slane %v1408, 2
  %v1410 = vadd.f32 %v1408, %v1409
  %v1411 = vrot.slane %v1410, 1
  %v1412 = vadd.f32 %v1410, %v1411
  %v1413 = vadd.f32 %v1322, %v1328
  %v1414 = vadd.f32 %v1413, %v1334
  %v1415 = vadd.f32 %v1414, %v1340
  %v1416 = vrot.slane %v1415, 4
  %v1417 = vadd.f32 %v1415, %v1416
  %v1418 = vrot.slane %v1417, 2
  %v1419 = vadd.f32 %v1417, %v1418
  %v1420 = vrot.slane %v1419, 1
  %v1421 = vadd.f32 %v1419, %v1420
  %v1422 = vmul.f32 %v1358, %v608
  %v1423 = vmul.f32 %v1367, %v608
  %v1424 = vmul.f32 %v1376, %v608
  %v1425 = vmul.f32 %v1385, %v608
  %v1426 = vmul.f32 %v1394, %v608
  %v1427 = vmul.f32 %v1403, %v608
  %v1428 = vmul.f32 %v1412, %v608
  %v1429 = vmul.f32 %v1421, %v608
  %v1430 = vsub.f32 %v1053, %v1422
  %v1431 = vsub.f32 %v1055, %v1423
  %v1432 = vsub.f32 %v1142, %v1424
  %v1433 = vsub.f32 %v1144, %v1425
  %v1434 = vsub.f32 %v1231, %v1426
  %v1435 = vsub.f32 %v1233, %v1427
  %v1436 = vsub.f32 %v1320, %v1428
  %v1437 = vsub.f32 %v1322, %v1429
  %v1438 = vsub.f32 %v1059, %v1422
  %v1439 = vsub.f32 %v1061, %v1423
  %v1440 = vsub.f32 %v1148, %v1424
  %v1441 = vsub.f32 %v1150, %v1425
  %v1442 = vsub.f32 %v1237, %v1426
  %v1443 = vsub.f32 %v1239, %v1427
  %v1444 = vsub.f32 %v1326, %v1428
  %v1445 = vsub.f32 %v1328, %v1429
  %v1446 = vsub.f32 %v1065, %v1422
  %v1447 = vsub.f32 %v1067, %v1423
  %v1448 = vsub.f32 %v1154, %v1424
  %v1449 = vsub.f32 %v1156, %v1425
  %v1450 = vsub.f32 %v1243, %v1426
  %v1451 = vsub.f32 %v1245, %v1427
  %v1452 = vsub.f32 %v1332, %v1428
  %v1453 = vsub.f32 %v1334, %v1429
  %v1454 = vsub.f32 %v1071, %v1422
  %v1455 = vsub.f32 %v1073, %v1423
  %v1456 = vsub.f32 %v1160, %v1424
  %v1457 = vsub.f32 %v1162, %v1425
  %v1458 = vsub.f32 %v1249, %v1426
  %v1459 = vsub.f32 %v1251, %v1427
  %v1460 = vsub.f32 %v1338, %v1428
  %v1461 = vsub.f32 %v1340, %v1429
  %v1462 = vmul.f32 %v1430, %v1430
  %v1463 = vmul.f32 %v1431, %v1431
  %v1464 = vmul.f32 %v1432, %v1432
  %v1465 = vmul.f32 %v1433, %v1433
  %v1466 = vmul.f32 %v1434, %v1434
  %v1467 = vmul.f32 %v1435, %v1435
  %v1468 = vmul.f32 %v1436, %v1436
  %v1469 = vmul.f32 %v1437, %v1437
  %v1470 = vmul.f32 %v1438, %v1438
  %v1471 = vmul.f32 %v1439, %v1439
  %v1472 = vmul.f32 %v1440, %v1440
  %v1473 = vmul.f32 %v1441, %v1441
  %v1474 = vmul.f32 %v1442, %v1442
  %v1475 = vmul.f32 %v1443, %v1443
  %v1476 = vmul.f32 %v1444, %v1444
  %v1477 = vmul.f32 %v1445, %v1445
  %v1478 = vmul.f32 %v1446, %v1446
  %v1479 = vmul.f32 %v1447, %v1447
  %v1480 = vmul.f32 %v1448, %v1448
  %v1481 = vmul.f32 %v1449, %v1449
  %v1482 = vmul.f32 %v1450, %v1450
  %v1483 = vmul.f32 %v1451, %v1451
  %v1484 = vmul.f32 %v1452, %v1452
  %v1485 = vmul.f32 %v1453, %v1453
  %v1486 = vmul.f32 %v1454, %v1454
  %v1487 = vmul.f32 %v1455, %v1455
  %v1488 = vmul.f32 %v1456, %v1456
  %v1489 = vmul.f32 %v1457, %v1457
  %v1490 = vmul.f32 %v1458, %v1458
  %v1491 = vmul.f32 %v1459, %v1459
  %v1492 = vmul.f32 %v1460, %v1460
  %v1493 = vmul.f32 %v1461, %v1461
  %v1494 = vadd.f32 %v1462, %v1470
  %v1495 = vadd.f32 %v1494, %v1478
  %v1496 = vadd.f32 %v1495, %v1486
  %v1497 = vrot.slane %v1496, 4
  %v1498 = vadd.f32 %v1496, %v1497
  %v1499 = vrot.slane %v1498, 2
  %v1500 = vadd.f32 %v1498, %v1499
  %v1501 = vrot.slane %v1500, 1
  %v1502 = vadd.f32 %v1500, %v1501
  %v1503 = vadd.f32 %v1463, %v1471
  %v1504 = vadd.f32 %v1503, %v1479
  %v1505 = vadd.f32 %v1504, %v1487
  %v1506 = vrot.slane %v1505, 4
  %v1507 = vadd.f32 %v1505, %v1506
  %v1508 = vrot.slane %v1507, 2
  %v1509 = vadd.f32 %v1507, %v1508
  %v1510 = vrot.slane %v1509, 1
  %v1511 = vadd.f32 %v1509, %v1510
  %v1512 = vadd.f32 %v1464, %v1472
  %v1513 = vadd.f32 %v1512, %v1480
  %v1514 = vadd.f32 %v1513, %v1488
  %v1515 = vrot.slane %v1514, 4
  %v1516 = vadd.f32 %v1514, %v1515
  %v1517 = vrot.slane %v1516, 2
  %v1518 = vadd.f32 %v1516, %v1517
  %v1519 = vrot.slane %v1518, 1
  %v1520 = vadd.f32 %v1518, %v1519
  %v1521 = vadd.f32 %v1465, %v1473
  %v1522 = vadd.f32 %v1521, %v1481
  %v1523 = vadd.f32 %v1522, %v1489
  %v1524 = vrot.slane %v1523, 4
  %v1525 = vadd.f32 %v1523, %v1524
  %v1526 = vrot.slane %v1525, 2
  %v1527 = vadd.f32 %v1525, %v1526
  %v1528 = vrot.slane %v1527, 1
  %v1529 = vadd.f32 %v1527, %v1528
  %v1530 = vadd.f32 %v1466, %v1474
  %v1531 = vadd.f32 %v1530, %v1482
  %v1532 = vadd.f32 %v1531, %v1490
  %v1533 = vrot.slane %v1532, 4
  %v1534 = vadd.f32 %v1532, %v1533
  %v1535 = vrot.slane %v1534, 2
  %v1536 = vadd.f32 %v1534, %v1535
  %v1537 = vrot.slane %v1536, 1
  %v1538 = vadd.f32 %v1536, %v1537
  %v1539 = vadd.f32 %v1467, %v1475
  %v1540 = vadd.f32 %v1539, %v1483
  %v1541 = vadd.f32 %v1540, %v1491
  %v1542 = vrot.slane %v1541, 4
  %v1543 = vadd.f32 %v1541, %v1542
  %v1544 = vrot.slane %v1543, 2
  %v1545 = vadd.f32 %v1543, %v1544
  %v1546 = vrot.slane %v1545, 1
  %v1547 = vadd.f32 %v1545, %v1546
  %v1548 = vadd.f32 %v1468, %v1476
  %v1549 = vadd.f32 %v1548, %v1484
  %v1550 = vadd.f32 %v1549, %v1492
  %v1551 = vrot.slane %v1550, 4
  %v1552 = vadd.f32 %v1550, %v1551
  %v1553 = vrot.slane %v1552, 2
  %v1554 = vadd.f32 %v1552, %v1553
  %v1555 = vrot.slane %v1554, 1
  %v1556 = vadd.f32 %v1554, %v1555
  %v1557 = vadd.f32 %v1469, %v1477
  %v1558 = vadd.f32 %v1557, %v1485
  %v1559 = vadd.f32 %v1558, %v1493
  %v1560 = vrot.slane %v1559, 4
  %v1561 = vadd.f32 %v1559, %v1560
  %v1562 = vrot.slane %v1561, 2
  %v1563 = vadd.f32 %v1561, %v1562
  %v1564 = vrot.slane %v1563, 1
  %v1565 = vadd.f32 %v1563, %v1564
  %v1566 = vmul.f32 %v1502, %v608
  %v1567 = vmul.f32 %v1511, %v608
  %v1568 = vmul.f32 %v1520, %v608
  %v1569 = vmul.f32 %v1529, %v608
  %v1570 = vmul.f32 %v1538, %v608
  %v1571 = vmul.f32 %v1547, %v608
  %v1572 = vmul.f32 %v1556, %v608
  %v1573 = vmul.f32 %v1565, %v608
  %v1574 = vadd.f32 %v1566, 1e-05
  %v1575 = vadd.f32 %v1567, 1e-05
  %v1576 = vadd.f32 %v1568, 1e-05
  %v1577 = vadd.f32 %v1569, 1e-05
  %v1578 = vadd.f32 %v1570, 1e-05
  %v1579 = vadd.f32 %v1571, 1e-05
  %v1580 = vadd.f32 %v1572, 1e-05
  %v1581 = vadd.f32 %v1573, 1e-05
  %v1582 = vrsqrt.pop %v1574
  %v1583 = vrsqrt.pop %v1575
  %v1584 = vrsqrt.pop %v1576
  %v1585 = vrsqrt.pop %v1577
  %v1586 = vrsqrt.pop %v1578
  %v1587 = vrsqrt.pop %v1579
  %v1588 = vrsqrt.pop %v1580
  %v1589 = vrsqrt.pop %v1581
  %v1590 = vmul.f32 %v1430, %v1582
  %v1591 = vmul.f32 %v1431, %v1583
  %v1592 = vmul.f32 %v1432, %v1584
  %v1593 = vmul.f32 %v1433, %v1585
  %v1594 = vmul.f32 %v1434, %v1586
  %v1595 = vmul.f32 %v1435, %v1587
  %v1596 = vmul.f32 %v1436, %v1588
  %v1597 = vmul.f32 %v1437, %v1589
  %v1598 = vmul.f32 %v1438, %v1582
  %v1599 = vmul.f32 %v1439, %v1583
  %v1600 = vmul.f32 %v1440, %v1584
  %v1601 = vmul.f32 %v1441, %v1585
  %v1602 = vmul.f32 %v1442, %v1586
  %v1603 = vmul.f32 %v1443, %v1587
  %v1604 = vmul.f32 %v1444, %v1588
  %v1605 = vmul.f32 %v1445, %v1589
  %v1606 = vmul.f32 %v1446, %v1582
  %v1607 = vmul.f32 %v1447, %v1583
  %v1608 = vmul.f32 %v1448, %v1584
  %v1609 = vmul.f32 %v1449, %v1585
  %v1610 = vmul.f32 %v1450, %v1586
  %v1611 = vmul.f32 %v1451, %v1587
  %v1612 = vmul.f32 %v1452, %v1588
  %v1613 = vmul.f32 %v1453, %v1589
  %v1614 = vmul.f32 %v1454, %v1582
  %v1615 = vmul.f32 %v1455, %v1583
  %v1616 = vmul.f32 %v1456, %v1584
  %v1617 = vmul.f32 %v1457, %v1585
  %v1618 = vmul.f32 %v1458, %v1586
  %v1619 = vmul.f32 %v1459, %v1587
  %v1620 = vmul.f32 %v1460, %v1588
  %v1621 = vmul.f32 %v1461, %v1589
  %1623 = vset.pattern.permute.xlu0 0
  %1624 = vperm.xlu0 %1623, %v1342
  %v1625 = vpop.permute.xlu0 %1624
  %1628 = vset.pattern.permute.xlu0 0
  %1629 = vperm.xlu0 %1628, %v1343
  %v1630 = vpop.permute.xlu0 %1629
  %1633 = vset.pattern.permute.xlu0 0
  %1634 = vperm.xlu0 %1633, %v1344
  %v1635 = vpop.permute.xlu0 %1634
  %1638 = vset.pattern.permute.xlu0 0
  %1639 = vperm.xlu0 %1638, %v1345
  %v1640 = vpop.permute.xlu0 %1639
  %v1642 = vmul.f32 %v1590, %v1625
  %v1643 = vmul.f32 %v1591, %v1625
  %v1644 = vmul.f32 %v1592, %v1625
  %v1645 = vmul.f32 %v1593, %v1625
  %v1646 = vmul.f32 %v1594, %v1625
  %v1647 = vmul.f32 %v1595, %v1625
  %v1648 = vmul.f32 %v1596, %v1625
  %v1649 = vmul.f32 %v1597, %v1625
  %v1650 = vmul.f32 %v1598, %v1630
  %v1651 = vmul.f32 %v1599, %v1630
  %v1652 = vmul.f32 %v1600, %v1630
  %v1653 = vmul.f32 %v1601, %v1630
  %v1654 = vmul.f32 %v1602, %v1630
  %v1655 = vmul.f32 %v1603, %v1630
  %v1656 = vmul.f32 %v1604, %v1630
  %v1657 = vmul.f32 %v1605, %v1630
  %v1658 = vmul.f32 %v1606, %v1635
  %v1659 = vmul.f32 %v1607, %v1635
  %v1660 = vmul.f32 %v1608, %v1635
  %v1661 = vmul.f32 %v1609, %v1635
  %v1662 = vmul.f32 %v1610, %v1635
  %v1663 = vmul.f32 %v1611, %v1635
  %v1664 = vmul.f32 %v1612, %v1635
  %v1665 = vmul.f32 %v1613, %v1635
  %v1666 = vmul.f32 %v1614, %v1640
  %v1667 = vmul.f32 %v1615, %v1640
  %v1668 = vmul.f32 %v1616, %v1640
  %v1669 = vmul.f32 %v1617, %v1640
  %v1670 = vmul.f32 %v1618, %v1640
  %v1671 = vmul.f32 %v1619, %v1640
  %v1672 = vmul.f32 %v1620, %v1640
  %v1673 = vmul.f32 %v1621, %v1640
  %1675 = vset.pattern.permute.xlu0 0
  %1676 = vperm.xlu0 %1675, %v1346
  %v1677 = vpop.permute.xlu0 %1676
  %1680 = vset.pattern.permute.xlu0 0
  %1681 = vperm.xlu0 %1680, %v1347
  %v1682 = vpop.permute.xlu0 %1681
  %1685 = vset.pattern.permute.xlu0 0
  %1686 = vperm.xlu0 %1685, %v1348
  %v1687 = vpop.permute.xlu0 %1686
  %1690 = vset.pattern.permute.xlu0 0
  %1691 = vperm.xlu0 %1690, %v1349
  %v1692 = vpop.permute.xlu0 %1691
  %v1694 = vadd.f32 %v1642, %v1677
  %v1695 = vadd.f32 %v1643, %v1677
  %v1696 = vadd.f32 %v1644, %v1677
  %v1697 = vadd.f32 %v1645, %v1677
  %v1698 = vadd.f32 %v1646, %v1677
  %v1699 = vadd.f32 %v1647, %v1677
  %v1700 = vadd.f32 %v1648, %v1677
  %v1701 = vadd.f32 %v1649, %v1677
  %v1702 = vadd.f32 %v1650, %v1682
  %v1703 = vadd.f32 %v1651, %v1682
  %v1704 = vadd.f32 %v1652, %v1682
  %v1705 = vadd.f32 %v1653, %v1682
  %v1706 = vadd.f32 %v1654, %v1682
  %v1707 = vadd.f32 %v1655, %v1682
  %v1708 = vadd.f32 %v1656, %v1682
  %v1709 = vadd.f32 %v1657, %v1682
  %v1710 = vadd.f32 %v1658, %v1687
  %v1711 = vadd.f32 %v1659, %v1687
  %v1712 = vadd.f32 %v1660, %v1687
  %v1713 = vadd.f32 %v1661, %v1687
  %v1714 = vadd.f32 %v1662, %v1687
  %v1715 = vadd.f32 %v1663, %v1687
  %v1716 = vadd.f32 %v1664, %v1687
  %v1717 = vadd.f32 %v1665, %v1687
  %v1718 = vadd.f32 %v1666, %v1692
  %v1719 = vadd.f32 %v1667, %v1692
  %v1720 = vadd.f32 %v1668, %v1692
  %v1721 = vadd.f32 %v1669, %v1692
  %v1722 = vadd.f32 %v1670, %v1692
  %v1723 = vadd.f32 %v1671, %v1692
  %v1724 = vadd.f32 %v1672, %v1692
  %v1725 = vadd.f32 %v1673, %v1692
  %v1726 = vmax.f32 %v1694, 0.0
  %v1727 = vmax.f32 %v1695, 0.0
  %v1728 = vmax.f32 %v1696, 0.0
  %v1729 = vmax.f32 %v1697, 0.0
  %v1730 = vmax.f32 %v1698, 0.0
  %v1731 = vmax.f32 %v1699, 0.0
  %v1732 = vmax.f32 %v1700, 0.0
  %v1733 = vmax.f32 %v1701, 0.0
  %v1734 = vmax.f32 %v1702, 0.0
  %v1735 = vmax.f32 %v1703, 0.0
  %v1736 = vmax.f32 %v1704, 0.0
  %v1737 = vmax.f32 %v1705, 0.0
  %v1738 = vmax.f32 %v1706, 0.0
  %v1739 = vmax.f32 %v1707, 0.0
  %v1740 = vmax.f32 %v1708, 0.0
  %v1741 = vmax.f32 %v1709, 0.0
  %v1742 = vmax.f32 %v1710, 0.0
  %v1743 = vmax.f32 %v1711, 0.0
  %v1744 = vmax.f32 %v1712, 0.0
  %v1745 = vmax.f32 %v1713, 0.0
  %v1746 = vmax.f32 %v1714, 0.0
  %v1747 = vmax.f32 %v1715, 0.0
  %v1748 = vmax.f32 %v1716, 0.0
  %v1749 = vmax.f32 %v1717, 0.0
  %v1750 = vmax.f32 %v1718, 0.0
  %v1751 = vmax.f32 %v1719, 0.0
  %v1752 = vmax.f32 %v1720, 0.0
  %v1753 = vmax.f32 %v1721, 0.0
  %v1754 = vmax.f32 %v1722, 0.0
  %v1755 = vmax.f32 %v1723, 0.0
  %v1756 = vmax.f32 %v1724, 0.0
  %v1757 = vmax.f32 %v1725, 0.0
  %1758 = vst [vmem:[%s9] sm:$0xff] %v1726
  %1759 = vst [vmem:[%s9 + $0x8] sm:$0xff] %v1727
  %1760 = vst [vmem:[%s9 + $0x10] sm:$0xff] %v1728
  %1761 = vst [vmem:[%s9 + $0x18] sm:$0xff] %v1729
  %1762 = vst [vmem:[%s9 + $0x20] sm:$0xff] %v1730
  %1763 = vst [vmem:[%s9 + $0x28] sm:$0xff] %v1731
  %1764 = vst [vmem:[%s9 + $0x30] sm:$0xff] %v1732
  %1765 = vst [vmem:[%s9 + $0x38] sm:$0xff] %v1733
  %1766 = vst [vmem:[%s9 + $0x40] sm:$0xff] %v1734
  %1767 = vst [vmem:[%s9 + $0x48] sm:$0xff] %v1735
  %1768 = vst [vmem:[%s9 + $0x50] sm:$0xff] %v1736
  %1769 = vst [vmem:[%s9 + $0x58] sm:$0xff] %v1737
  %1770 = vst [vmem:[%s9 + $0x60] sm:$0xff] %v1738
  %1771 = vst [vmem:[%s9 + $0x68] sm:$0xff] %v1739
  %1772 = vst [vmem:[%s9 + $0x70] sm:$0xff] %v1740
  %1773 = vst [vmem:[%s9 + $0x78] sm:$0xff] %v1741
  %1774 = vst [vmem:[%s9 + $0x80] sm:$0xff] %v1742
  %1775 = vst [vmem:[%s9 + $0x88] sm:$0xff] %v1743
  %1776 = vst [vmem:[%s9 + $0x90] sm:$0xff] %v1744
  %1777 = vst [vmem:[%s9 + $0x98] sm:$0xff] %v1745
  %1778 = vst [vmem:[%s9 + $0xa0] sm:$0xff] %v1746
  %1779 = vst [vmem:[%s9 + $0xa8] sm:$0xff] %v1747
  %1780 = vst [vmem:[%s9 + $0xb0] sm:$0xff] %v1748
  %1781 = vst [vmem:[%s9 + $0xb8] sm:$0xff] %v1749
  %1782 = vst [vmem:[%s9 + $0xc0] sm:$0xff] %v1750
  %1783 = vst [vmem:[%s9 + $0xc8] sm:$0xff] %v1751
  %1784 = vst [vmem:[%s9 + $0xd0] sm:$0xff] %v1752
  %1785 = vst [vmem:[%s9 + $0xd8] sm:$0xff] %v1753
  %1786 = vst [vmem:[%s9 + $0xe0] sm:$0xff] %v1754
  %1787 = vst [vmem:[%s9 + $0xe8] sm:$0xff] %v1755
  %1788 = vst [vmem:[%s9 + $0xf0] sm:$0xff] %v1756
  %1789 = vst [vmem:[%s9 + $0xf8] sm:$0xff] %v1757
  // Predicated region
  $region38: #{hebbian_forward.1} parent=0 // pred_check
    _
  $region39: #{hebbian_forward.1} parent=0 // pred_check_branch
    %1791 = sbr.rel (0) target = $region41
  $region40: #{hebbian_forward.1} parent=0 // pred_region
    _
  $region41: #{hebbian_forward.1} parent=0 // pred_fallthru
    _
  // Predicated region
  $region42: #{hebbian_forward.1} parent=0 // pred_check
    _
  $region43: #{hebbian_forward.1} parent=0 // pred_check_branch
    %1793 = sbr.rel (0) target = $region45
  $region44: #{hebbian_forward.1} parent=0 // pred_region
    _
  $region45: #{hebbian_forward.1} parent=0 // pred_fallthru
    _

</llo_original>
